<compile_context>
chip_gen: v6e
topology: v6e:2x2x1
jax: 0.10.0
libtpu: 0.0.40
codegen_flags: <defaults>
</compile_context>

<pallas_src>
import functools

import jax
import jax.numpy as jnp
from jax.experimental import pallas as pl
from jax.experimental.pallas import tpu as pltpu

LANE = 128


def _round_up(n, m):
    return ((n + m - 1) // m) * m


def _pad_axis(x, axis, target):
    """Zero-pad `x` along `axis` up to length `target` (no-op if already long enough)."""
    pad = target - x.shape[axis]
    if pad <= 0:
        return x
    widths = [(0, 0)] * x.ndim
    widths[axis] = (0, pad)
    return jnp.pad(x, widths)


# ------------------------------------------------------------------------------------------------
# Fused 2-phase kernel.
#   grid = (2, n_tiles): phase 0 -> conv1 + relu + dropout into h scratch (row tile per step);
#                        phase 1 -> conv2 from the full h scratch (row tile per step).
# ------------------------------------------------------------------------------------------------
def _t_sage_kernel(t_adj_ref, n_adj_ref, feat_ref, drop_ref,
                   w1r_ref, w1o_ref, b1_ref, w2r_ref, w2o_ref, b2_ref,
                   out_ref, h_ref, *, tm, ones_in, ones_hid):
    phase = pl.program_id(0)
    m = pl.program_id(1)
    row0 = pl.multiple_of(m * tm, tm)

    @pl.when(phase == 0)
    def _layer1():
        adj = t_adj_ref[...]                                    # (TM, NCOL) bf16, 0/1 exact
        x_all = feat_ref[...]                                   # (NCOL, IN_P) f32, ones lane planted
        # Mean aggregation on the MXU; the planted ones-lane makes agg[:, ones_in] = rowsum(adj),
        # so the degree needs no separate adjacency cast / XLU reduce.
        agg = jnp.dot(adj, x_all.astype(jnp.bfloat16),
                      preferred_element_type=jnp.float32)       # (TM, IN_P) f32
        deg = jnp.maximum(agg[:, ones_in:ones_in + 1], 1.0)     # clamp(rowsum, min=1)
        agg = agg * pl.reciprocal(deg, approx=False)            # EUP reciprocal, exact-ish
        x_root = feat_ref[pl.ds(row0, tm), :]                   # (TM, IN_P) f32 root term
        h = (jnp.dot(agg, w1r_ref[...], preferred_element_type=jnp.float32)
             + jnp.dot(x_root, w1o_ref[...], preferred_element_type=jnp.float32)
             + b1_ref[...])
        h = jnp.maximum(h, 0.0)                                 # relu
        h = h * drop_ref[...].astype(jnp.float32)               # dropout: 0 / 1/(1-p) multiplier
        # Plant a ones-lane in h's zero padding so layer-2 degrees also fall out of the MXU.
        lanes = jax.lax.broadcasted_iota(jnp.int32, h.shape, 1)
        h = jnp.where(lanes == ones_hid, 1.0, h)
        h_ref[pl.ds(row0, tm), :] = h                           # persistent VMEM scratch

    @pl.when(phase == 1)
    def _layer2():
        adj = n_adj_ref[...]                                    # (TM, J_P) bf16
        h_all = h_ref[...]                                      # (J_P, HID_P) f32
        agg = jnp.dot(adj, h_all.astype(jnp.bfloat16),
                      preferred_element_type=jnp.float32)       # (TM, HID_P) f32
        deg = jnp.maximum(agg[:, ones_hid:ones_hid + 1], 1.0)
        agg = agg * pl.reciprocal(deg, approx=False)
        h_root = h_ref[pl.ds(row0, tm), :]
        out = (jnp.dot(agg, w2r_ref[...], preferred_element_type=jnp.float32)
               + jnp.dot(h_root, w2o_ref[...], preferred_element_type=jnp.float32)
               + b2_ref[...])
        out_ref[...] = out.astype(out_ref.dtype)


# ------------------------------------------------------------------------------------------------
# Parameters
# ------------------------------------------------------------------------------------------------
def init_t_sage_params(key, in_channels, hidden_channels, out_channels):
    """Synthetic parameters matching SAGEConv lin_rel / lin_root (+ lin_rel bias) layouts."""
    k = jax.random.split(key, 6)
    s1 = 1.0 / jnp.sqrt(in_channels)
    s2 = 1.0 / jnp.sqrt(hidden_channels)
    return {
        "w1_rel":  jax.random.uniform(k[0], (in_channels, hidden_channels), jnp.float32, -s1, s1),
        "w1_root": jax.random.uniform(k[1], (in_channels, hidden_channels), jnp.float32, -s1, s1),
        "b1":      jax.random.uniform(k[2], (1, hidden_channels), jnp.float32, -s1, s1),
        "w2_rel":  jax.random.uniform(k[3], (hidden_channels, out_channels), jnp.float32, -s2, s2),
        "w2_root": jax.random.uniform(k[4], (hidden_channels, out_channels), jnp.float32, -s2, s2),
        "b2":      jax.random.uniform(k[5], (1, out_channels), jnp.float32, -s2, s2),
    }


def pack_t_sage_params(params):
    """Zero-pad channel axes to 128 lanes; reserve one spare lane per input axis for the ones-lane
    degree trick (its weight rows are in the zero padding, so it never affects the projection)."""
    in_c, hid = params["w1_rel"].shape
    out_c = params["w2_rel"].shape[1]
    in_p = _round_up(in_c + 1, LANE)     # +1 -> guaranteed spare lane at index in_c
    hid_p = _round_up(hid + 1, LANE)     # +1 -> guaranteed spare lane at index hid
    out_p = _round_up(out_c, LANE)

    def pad2(w, r, c):
        return _pad_axis(_pad_axis(w, 0, r), 1, c)

    return {
        "w1_rel":  pad2(params["w1_rel"], in_p, hid_p),
        "w1_root": pad2(params["w1_root"], in_p, hid_p),
        "b1":      _pad_axis(params["b1"], 1, hid_p),
        "w2_rel":  pad2(params["w2_rel"], hid_p, out_p),
        "w2_root": pad2(params["w2_root"], hid_p, out_p),
        "b2":      _pad_axis(params["b2"], 1, out_p),
        "dims": (in_c, hid, out_c, in_p, hid_p, out_p),
    }


# ------------------------------------------------------------------------------------------------
# Forward wrapper
# ------------------------------------------------------------------------------------------------
def make_t_sage_forward(params):
    """Builds a jitted forward(feat, t_adj, n_adj, i, j, drop_mult) for fixed parameters."""
    packed = pack_t_sage_params(params)
    in_c, hid, out_c, in_p, hid_p, out_p = packed["dims"]

    @functools.partial(jax.jit, static_argnums=(3, 4))
    def forward(feat, t_adj, n_adj, i, j, drop_mult):
        n = feat.shape[0]
        assert i <= j == n_adj.shape[0] and j <= n

        # Row tile: 256 for real sizes (v6e/v7x MXU is 256x256), 128 when the graph is tiny.
        tm = LANE if _round_up(j, LANE) <= LANE else 256
        j_p = _round_up(j, tm)                     # node rows kept after layer 1 (padded)
        n_tiles = j_p // tm
        ncol = max(_round_up(n, LANE), j_p)        # layer-1 contraction extent (t_adj columns)

        # ---- host-side padding / dtype prep ------------------------------------------------
        # Adjacency entries are 0/1 -> exact in bf16 (half the VMEM/HBM bytes, bf16 MXU rate).
        t_adj_k = _pad_axis(_pad_axis(t_adj.astype(jnp.bfloat16), 1, ncol), 0, j_p)[:j_p]
        n_adj_k = _pad_axis(_pad_axis(n_adj.astype(jnp.bfloat16), 0, j_p), 1, j_p)
        feat_k = _pad_axis(_pad_axis(feat.astype(jnp.float32), 0, ncol), 1, in_p)
        feat_k = feat_k.at[:, in_c].set(1.0)       # ones lane: row degree falls out of the MXU
        # Dropout multiplier (0 / 1/(1-p)); rows >= j padded with 0 so padded h rows are zeroed.
        drop_k = _pad_axis(_pad_axis(drop_mult.astype(jnp.bfloat16), 0, j_p), 1, hid_p)

        kernel = functools.partial(_t_sage_kernel, tm=tm, ones_in=in_c, ones_hid=hid)

        # Advisory cost estimate for XLA's scheduler.
        flops = (2 * j_p * ncol * in_p + 4 * j_p * in_p * hid_p
                 + 2 * j_p * j_p * hid_p + 4 * j_p * hid_p * out_p)
        weight_bytes = 4 * (2 * in_p * hid_p + hid_p + 2 * hid_p * out_p + out_p)
        bytes_accessed = (2 * j_p * ncol + 2 * j_p * j_p + 4 * ncol * in_p
                          + 2 * j_p * hid_p + 4 * j_p * out_p + weight_bytes)

        # VMEM budget: double-buffered streamed tiles + resident feat/weights + h scratch.
        vmem_est = (2 * 2 * tm * ncol + 2 * 2 * tm * j_p      # adjacency tiles (bf16, x2 buffers)
                    + 2 * 4 * ncol * in_p                      # feat (resident, counted x2)
                    + 2 * 2 * tm * hid_p                       # dropout tiles (bf16)
                    + 2 * weight_bytes                         # weights/biases
                    + 4 * j_p * hid_p                          # h scratch (f32)
                    + 2 * 4 * tm * out_p)                      # output tiles
        vmem_limit = int(min(max(2 * vmem_est, 32 << 20), 64 << 20))

        grid_spec = pltpu.PrefetchScalarGridSpec(
            num_scalar_prefetch=0,
            grid=(2, n_tiles),                      # (phase, node-row tile), iterated phase-major
            in_specs=[
                # t_adj: stream row tiles in phase 0; pin to the last block in phase 1 (no re-DMA).
                pl.BlockSpec((tm, ncol),
                             lambda p, m: (m * (1 - p) + (n_tiles - 1) * p, 0)),
                # n_adj: pinned to block 0 in phase 0; stream row tiles in phase 1.
                pl.BlockSpec((tm, j_p), lambda p, m: (m * p, 0)),
                # feat: fully resident (fetched once).
                pl.BlockSpec((ncol, in_p), lambda p, m: (0, 0)),
                # dropout multiplier: row tiles in phase 0, pinned in phase 1.
                pl.BlockSpec((tm, hid_p),
                             lambda p, m: (m * (1 - p) + (n_tiles - 1) * p, 0)),
                # weights / biases: resident.
                pl.BlockSpec((in_p, hid_p), lambda p, m: (0, 0)),
                pl.BlockSpec((in_p, hid_p), lambda p, m: (0, 0)),
                pl.BlockSpec((1, hid_p), lambda p, m: (0, 0)),
                pl.BlockSpec((hid_p, out_p), lambda p, m: (0, 0)),
                pl.BlockSpec((hid_p, out_p), lambda p, m: (0, 0)),
                pl.BlockSpec((1, out_p), lambda p, m: (0, 0)),
            ],
            # Output row tiles are only written (and flushed) during phase 1.
            out_specs=pl.BlockSpec((tm, out_p), lambda p, m: (m * p, 0)),
            scratch_shapes=[pltpu.VMEM((j_p, hid_p), jnp.float32)],   # hidden activation, resident
        )

        out = pl.pallas_call(
            kernel,
            out_shape=jax.ShapeDtypeStruct((j_p, out_p), jnp.float32),
            grid_spec=grid_spec,
            compiler_params=pltpu.CompilerParams(
                dimension_semantics=("arbitrary", "arbitrary"),
                vmem_limit_bytes=vmem_limit),
            cost_estimate=pl.CostEstimate(flops=flops, transcendentals=2 * j_p,
                                          bytes_accessed=bytes_accessed),
        )(t_adj_k, n_adj_k, feat_k, drop_k,
          packed["w1_rel"], packed["w1_root"], packed["b1"],
          packed["w2_rel"], packed["w2_root"], packed["b2"])
        return out[:i, :out_c]

    return forward


def t_sage_reference(params, feat, t_adj, n_adj, i, j, drop_mult):
    """Pure-JAX reference of the torch module (uses the same dropout multiplier as the kernel)."""
    def conv(x, adj, w_rel, w_root, b):
        deg = jnp.maximum(jnp.sum(adj, axis=-1, keepdims=True), 1.0)
        return ((adj @ x) / deg) @ w_rel + x @ w_root + b

    x1 = conv(feat, t_adj, params["w1_rel"], params["w1_root"], params["b1"])[:j]
    x1 = jnp.maximum(x1, 0.0) * drop_mult
    x2 = conv(x1, n_adj, params["w2_rel"], params["w2_root"], params["b2"])
    return x2[:i]


if __name__ == "__main__":
    # Small shapes consistent with the module.
    N = 16                  # nodes seen by conv1
    in_channels = 8
    hidden_channels = 32
    out_channels = 16
    j = 12                  # nodes kept after layer 1 (n_adj is [j, j])
    i = 8                   # nodes kept after layer 2

    key = jax.random.PRNGKey(0)
    k_feat, k_adj1, k_adj2, k_par, k_drop = jax.random.split(key, 5)

    feat = jax.random.normal(k_feat, (N, in_channels), jnp.float32)
    t_adj = (jax.random.uniform(k_adj1, (N, N)) < 0.3).astype(jnp.float32)
    n_adj = (jax.random.uniform(k_adj2, (j, j)) < 0.3).astype(jnp.float32)

    params = init_t_sage_params(k_par, in_channels, hidden_channels, out_channels)
    forward = make_t_sage_forward(params)

    # Train-mode dropout multiplier (p=0.5): keep with prob 0.5, scale kept values by 1/(1-p)=2.
    # Caller supplies fresh randomness each step; 0 and 2.0 are exact in bf16.
    drop_mult = jax.random.bernoulli(k_drop, 0.5, (j, hidden_channels)).astype(jnp.float32) * 2.0

    out = jax.block_until_ready(forward(feat, t_adj, n_adj, i, j, drop_mult))
    assert out.shape == (i, out_channels), out.shape

    ref = t_sage_reference(params, feat, t_adj, n_adj, i, j, drop_mult)
    err = float(jnp.max(jnp.abs(out - ref)))
    assert jnp.allclose(out, ref, rtol=5e-2, atol=5e-2), err

    print("KERNEL_OK")
</pallas_src>

<mosaic_0001>
module attributes {stable_mosaic.version = 11 : i64} {
  func.func @_t_sage_kernel(%arg0: i32, %arg1: i32, %arg2: memref<128x128xbf16, #tpu.memory_space<vmem>>, %arg3: memref<128x128xbf16, #tpu.memory_space<vmem>>, %arg4: memref<128x128xf32, #tpu.memory_space<vmem>>, %arg5: memref<128x128xbf16, #tpu.memory_space<vmem>>, %arg6: memref<128x128xf32, #tpu.memory_space<vmem>>, %arg7: memref<128x128xf32, #tpu.memory_space<vmem>>, %arg8: memref<1x128xf32, #tpu.memory_space<vmem>>, %arg9: memref<128x128xf32, #tpu.memory_space<vmem>>, %arg10: memref<128x128xf32, #tpu.memory_space<vmem>>, %arg11: memref<1x128xf32, #tpu.memory_space<vmem>>, %arg12: memref<128x128xf32, #tpu.memory_space<vmem>>, %arg13: memref<128x128xf32, #tpu.memory_space<vmem>>) attributes {dimension_semantics = [#tpu.dimension_semantics<arbitrary>, #tpu.dimension_semantics<arbitrary>], iteration_bounds = array<i64: 2, 1>, scalar_prefetch = 0 : i64, scratch_operands = 1 : i64, tpu.core_type = #tpu.core_type<tc>, window_params = [{transform_indices = @transform_0, window_bounds = array<i64: 128, 128>}, {transform_indices = @transform_1, window_bounds = array<i64: 128, 128>}, {pipeline_mode = #tpu.pipeline_mode<synchronous>, transform_indices = @transform_2, window_bounds = array<i64: 128, 128>}, {transform_indices = @transform_3, window_bounds = array<i64: 128, 128>}, {pipeline_mode = #tpu.pipeline_mode<synchronous>, transform_indices = @transform_4, window_bounds = array<i64: 128, 128>}, {pipeline_mode = #tpu.pipeline_mode<synchronous>, transform_indices = @transform_5, window_bounds = array<i64: 128, 128>}, {pipeline_mode = #tpu.pipeline_mode<synchronous>, transform_indices = @transform_6, window_bounds = array<i64: 1, 128>}, {pipeline_mode = #tpu.pipeline_mode<synchronous>, transform_indices = @transform_7, window_bounds = array<i64: 128, 128>}, {pipeline_mode = #tpu.pipeline_mode<synchronous>, transform_indices = @transform_8, window_bounds = array<i64: 128, 128>}, {pipeline_mode = #tpu.pipeline_mode<synchronous>, transform_indices = @transform_9, window_bounds = array<i64: 1, 128>}, {transform_indices = @transform_10, window_bounds = array<i64: 128, 128>}]} {
    %c128_i32 = arith.constant 128 : i32
    %0 = arith.muli %arg1, %c128_i32 : i32
    %1 = tpu.assume_multiple %0, 128 : i32
    %c0_i32 = arith.constant 0 : i32
    %2 = arith.cmpi eq, %arg0, %c0_i32 : i32
    %3 = arith.extui %2 : i1 to i32
    %c0_i32_0 = arith.constant 0 : i32
    %4 = arith.cmpi ne, %3, %c0_i32_0 : i32
    scf.if %4 {
      %c0 = arith.constant 0 : index
      %c0_2 = arith.constant 0 : index
      %8 = vector.load %arg2[%c0, %c0_2] : memref<128x128xbf16, #tpu.memory_space<vmem>>, vector<128x128xbf16>
      %c0_3 = arith.constant 0 : index
      %c0_4 = arith.constant 0 : index
      %9 = vector.load %arg4[%c0_3, %c0_4] : memref<128x128xf32, #tpu.memory_space<vmem>>, vector<128x128xf32>
      %10 = arith.truncf %9 : vector<128x128xf32> to vector<128x128xbf16>
      %cst = arith.constant dense<0.000000e+00> : vector<128x128xf32>
      %11 = tpu.matmul %8, %10, %cst {dimension_numbers = #tpu.dot_dimension_numbers<[1], [0], [0], [1], [0, 0, 1, 1], [], []>} : vector<128x128xbf16>, vector<128x128xbf16>, vector<128x128xf32> -> vector<128x128xf32>
      %12 = vector.extract_strided_slice %11 {offsets = [0, 8], sizes = [128, 1], strides = [1, 1]} : vector<128x128xf32> to vector<128x1xf32>
      %cst_5 = arith.constant 1.000000e+00 : f32
      %13 = vector.broadcast %cst_5 : f32 to vector<128x1xf32>
      %14 = arith.maximumf %12, %13 : vector<128x1xf32>
      %15 = tpu.reciprocal %14 : vector<128x1xf32> -> vector<128x1xf32>
      %16 = vector.broadcast %15 : vector<128x1xf32> to vector<128x128xf32>
      %17 = arith.mulf %11, %16 : vector<128x128xf32>
      %18 = arith.index_cast %1 : i32 to index
      %c0_6 = arith.constant 0 : index
      %19 = vector.load %arg4[%18, %c0_6] : memref<128x128xf32, #tpu.memory_space<vmem>>, vector<128x128xf32>
      %c0_7 = arith.constant 0 : index
      %c0_8 = arith.constant 0 : index
      %20 = vector.load %arg6[%c0_7, %c0_8] : memref<128x128xf32, #tpu.memory_space<vmem>>, vector<128x128xf32>
      %cst_9 = arith.constant dense<0.000000e+00> : vector<128x128xf32>
      %21 = tpu.matmul %17, %20, %cst_9 {dimension_numbers = #tpu.dot_dimension_numbers<[1], [0], [0], [1], [0, 0, 1, 1], [], []>} : vector<128x128xf32>, vector<128x128xf32>, vector<128x128xf32> -> vector<128x128xf32>
      %c0_10 = arith.constant 0 : index
      %c0_11 = arith.constant 0 : index
      %22 = vector.load %arg7[%c0_10, %c0_11] : memref<128x128xf32, #tpu.memory_space<vmem>>, vector<128x128xf32>
      %cst_12 = arith.constant dense<0.000000e+00> : vector<128x128xf32>
      %23 = tpu.matmul %19, %22, %cst_12 {dimension_numbers = #tpu.dot_dimension_numbers<[1], [0], [0], [1], [0, 0, 1, 1], [], []>} : vector<128x128xf32>, vector<128x128xf32>, vector<128x128xf32> -> vector<128x128xf32>
      %24 = arith.addf %21, %23 : vector<128x128xf32>
      %c0_13 = arith.constant 0 : index
      %c0_14 = arith.constant 0 : index
      %25 = vector.load %arg8[%c0_13, %c0_14] : memref<1x128xf32, #tpu.memory_space<vmem>>, vector<1x128xf32>
      %26 = vector.broadcast %25 : vector<1x128xf32> to vector<128x128xf32>
      %27 = arith.addf %24, %26 : vector<128x128xf32>
      %cst_15 = arith.constant 0.000000e+00 : f32
      %28 = vector.broadcast %cst_15 : f32 to vector<128x128xf32>
      %29 = arith.maximumf %27, %28 : vector<128x128xf32>
      %c0_16 = arith.constant 0 : index
      %c0_17 = arith.constant 0 : index
      %30 = vector.load %arg5[%c0_16, %c0_17] : memref<128x128xbf16, #tpu.memory_space<vmem>>, vector<128x128xbf16>
      %31 = arith.extf %30 : vector<128x128xbf16> to vector<128x128xf32>
      %32 = arith.mulf %29, %31 : vector<128x128xf32>
      %33 = tpu.iota {dimensions = array<i32: 1>} : vector<128x128xi32>
      %c32_i32 = arith.constant 32 : i32
      %34 = vector.broadcast %c32_i32 : i32 to vector<128x128xi32>
      %35 = arith.cmpi eq, %33, %34 : vector<128x128xi32>
      %cst_18 = arith.constant 1.000000e+00 : f32
      %36 = vector.broadcast %cst_18 : f32 to vector<128x128xf32>
      %37 = arith.select %35, %36, %32 : vector<128x128xi1>, vector<128x128xf32>
      %38 = arith.index_cast %1 : i32 to index
      %c0_19 = arith.constant 0 : index
      %39 = vector.load %arg13[%38, %c0_19] : memref<128x128xf32, #tpu.memory_space<vmem>>, vector<128x128xf32>
      tpu.vector_store %arg13[%38, %c0_19], %37 {strides = array<i32>} : memref<128x128xf32, #tpu.memory_space<vmem>>, vector<128x128xf32>,
    } else {
    }
    %c1_i32 = arith.constant 1 : i32
    %5 = arith.cmpi eq, %arg0, %c1_i32 : i32
    %6 = arith.extui %5 : i1 to i32
    %c0_i32_1 = arith.constant 0 : i32
    %7 = arith.cmpi ne, %6, %c0_i32_1 : i32
    scf.if %7 {
      %c0 = arith.constant 0 : index
      %c0_2 = arith.constant 0 : index
      %8 = vector.load %arg3[%c0, %c0_2] : memref<128x128xbf16, #tpu.memory_space<vmem>>, vector<128x128xbf16>
      %c0_3 = arith.constant 0 : index
      %c0_4 = arith.constant 0 : index
      %9 = vector.load %arg13[%c0_3, %c0_4] : memref<128x128xf32, #tpu.memory_space<vmem>>, vector<128x128xf32>
      %10 = arith.truncf %9 : vector<128x128xf32> to vector<128x128xbf16>
      %cst = arith.constant dense<0.000000e+00> : vector<128x128xf32>
      %11 = tpu.matmul %8, %10, %cst {dimension_numbers = #tpu.dot_dimension_numbers<[1], [0], [0], [1], [0, 0, 1, 1], [], []>} : vector<128x128xbf16>, vector<128x128xbf16>, vector<128x128xf32> -> vector<128x128xf32>
      %12 = vector.extract_strided_slice %11 {offsets = [0, 32], sizes = [128, 1], strides = [1, 1]} : vector<128x128xf32> to vector<128x1xf32>
      %cst_5 = arith.constant 1.000000e+00 : f32
      %13 = vector.broadcast %cst_5 : f32 to vector<128x1xf32>
      %14 = arith.maximumf %12, %13 : vector<128x1xf32>
      %15 = tpu.reciprocal %14 : vector<128x1xf32> -> vector<128x1xf32>
      %16 = vector.broadcast %15 : vector<128x1xf32> to vector<128x128xf32>
      %17 = arith.mulf %11, %16 : vector<128x128xf32>
      %18 = arith.index_cast %1 : i32 to index
      %c0_6 = arith.constant 0 : index
      %19 = vector.load %arg13[%18, %c0_6] : memref<128x128xf32, #tpu.memory_space<vmem>>, vector<128x128xf32>
      %c0_7 = arith.constant 0 : index
      %c0_8 = arith.constant 0 : index
      %20 = vector.load %arg9[%c0_7, %c0_8] : memref<128x128xf32, #tpu.memory_space<vmem>>, vector<128x128xf32>
      %cst_9 = arith.constant dense<0.000000e+00> : vector<128x128xf32>
      %21 = tpu.matmul %17, %20, %cst_9 {dimension_numbers = #tpu.dot_dimension_numbers<[1], [0], [0], [1], [0, 0, 1, 1], [], []>} : vector<128x128xf32>, vector<128x128xf32>, vector<128x128xf32> -> vector<128x128xf32>
      %c0_10 = arith.constant 0 : index
      %c0_11 = arith.constant 0 : index
      %22 = vector.load %arg10[%c0_10, %c0_11] : memref<128x128xf32, #tpu.memory_space<vmem>>, vector<128x128xf32>
      %cst_12 = arith.constant dense<0.000000e+00> : vector<128x128xf32>
      %23 = tpu.matmul %19, %22, %cst_12 {dimension_numbers = #tpu.dot_dimension_numbers<[1], [0], [0], [1], [0, 0, 1, 1], [], []>} : vector<128x128xf32>, vector<128x128xf32>, vector<128x128xf32> -> vector<128x128xf32>
      %24 = arith.addf %21, %23 : vector<128x128xf32>
      %c0_13 = arith.constant 0 : index
      %c0_14 = arith.constant 0 : index
      %25 = vector.load %arg11[%c0_13, %c0_14] : memref<1x128xf32, #tpu.memory_space<vmem>>, vector<1x128xf32>
      %26 = vector.broadcast %25 : vector<1x128xf32> to vector<128x128xf32>
      %27 = arith.addf %24, %26 : vector<128x128xf32>
      %c0_15 = arith.constant 0 : index
      %c0_16 = arith.constant 0 : index
      %28 = vector.load %arg12[%c0_15, %c0_16] : memref<128x128xf32, #tpu.memory_space<vmem>>, vector<128x128xf32>
      tpu.vector_store %arg12[%c0_15, %c0_16], %27 {strides = array<i32>} : memref<128x128xf32, #tpu.memory_space<vmem>>, vector<128x128xf32>,
    } else {
    }
    return
  }
  func.func @transform_0(%arg0: i32, %arg1: i32) -> (i32, i32) {
    %c1_i32 = arith.constant 1 : i32
    %0 = arith.subi %c1_i32, %arg0 : i32
    %1 = arith.muli %arg1, %0 : i32
    %c0_i32 = arith.constant 0 : i32
    %2 = arith.muli %c0_i32, %arg0 : i32
    %3 = arith.addi %1, %2 : i32
    %c0_i32_0 = arith.constant 0 : i32
    %c0_i32_1 = arith.constant 0 : i32
    return %3, %c0_i32_0 : i32, i32
  }
  func.func @transform_1(%arg0: i32, %arg1: i32) -> (i32, i32) {
    %0 = arith.muli %arg1, %arg0 : i32
    %c0_i32 = arith.constant 0 : i32
    %c0_i32_0 = arith.constant 0 : i32
    return %0, %c0_i32 : i32, i32
  }
  func.func @transform_2(%arg0: i32, %arg1: i32) -> (i32, i32) {
    %c0_i32 = arith.constant 0 : i32
    %c0_i32_0 = arith.constant 0 : i32
    %c0_i32_1 = arith.constant 0 : i32
    return %c0_i32, %c0_i32_0 : i32, i32
  }
  func.func @transform_3(%arg0: i32, %arg1: i32) -> (i32, i32) {
    %c1_i32 = arith.constant 1 : i32
    %0 = arith.subi %c1_i32, %arg0 : i32
    %1 = arith.muli %arg1, %0 : i32
    %c0_i32 = arith.constant 0 : i32
    %2 = arith.muli %c0_i32, %arg0 : i32
    %3 = arith.addi %1, %2 : i32
    %c0_i32_0 = arith.constant 0 : i32
    %c0_i32_1 = arith.constant 0 : i32
    return %3, %c0_i32_0 : i32, i32
  }
  func.func @transform_4(%arg0: i32, %arg1: i32) -> (i32, i32) {
    %c0_i32 = arith.constant 0 : i32
    %c0_i32_0 = arith.constant 0 : i32
    %c0_i32_1 = arith.constant 0 : i32
    return %c0_i32, %c0_i32_0 : i32, i32
  }
  func.func @transform_5(%arg0: i32, %arg1: i32) -> (i32, i32) {
    %c0_i32 = arith.constant 0 : i32
    %c0_i32_0 = arith.constant 0 : i32
    %c0_i32_1 = arith.constant 0 : i32
    return %c0_i32, %c0_i32_0 : i32, i32
  }
  func.func @transform_6(%arg0: i32, %arg1: i32) -> (i32, i32) {
    %c0_i32 = arith.constant 0 : i32
    %c0_i32_0 = arith.constant 0 : i32
    %c0_i32_1 = arith.constant 0 : i32
    return %c0_i32, %c0_i32_0 : i32, i32
  }
  func.func @transform_7(%arg0: i32, %arg1: i32) -> (i32, i32) {
    %c0_i32 = arith.constant 0 : i32
    %c0_i32_0 = arith.constant 0 : i32
    %c0_i32_1 = arith.constant 0 : i32
    return %c0_i32, %c0_i32_0 : i32, i32
  }
  func.func @transform_8(%arg0: i32, %arg1: i32) -> (i32, i32) {
    %c0_i32 = arith.constant 0 : i32
    %c0_i32_0 = arith.constant 0 : i32
    %c0_i32_1 = arith.constant 0 : i32
    return %c0_i32, %c0_i32_0 : i32, i32
  }
  func.func @transform_9(%arg0: i32, %arg1: i32) -> (i32, i32) {
    %c0_i32 = arith.constant 0 : i32
    %c0_i32_0 = arith.constant 0 : i32
    %c0_i32_1 = arith.constant 0 : i32
    return %c0_i32, %c0_i32_0 : i32, i32
  }
  func.func @transform_10(%arg0: i32, %arg1: i32) -> (i32, i32) {
    %0 = arith.muli %arg1, %arg0 : i32
    %c0_i32 = arith.constant 0 : i32
    %c0_i32_0 = arith.constant 0 : i32
    return %0, %c0_i32 : i32, i32
  }
}

</mosaic_0001>

<llo_original>
// kernel: forward.1
$region0: #{forward.1}
  #allocation0 [shape = 'u32[]', space=smem, size = 0x4, offset = 0x4, fixed_abs, tag = 'smem constant byte address 0x4 - core index']
  #allocation1 [shape = 'u32[144,128]{1,0:T(1,128)}', space=vmem, size = 0x12000, scoped, tag = 'internal scratch']
  #allocation2 [shape = 'f32[128,128]{1,0:T(8,128)}', space=vmem, size = 0x10000, scoped, tag = 'scratch operand']
  %s0 = inlined_call_operand.vmem [shape: bf16[128,128], index: 0, kind: input, shape index: {}]
  %s1 = inlined_call_operand.vmem [shape: bf16[128,128], index: 1, kind: input, shape index: {}]
  %s2 = inlined_call_operand.vmem [shape: f32[128,128], index: 2, kind: input, shape index: {}]
  %s3 = inlined_call_operand.vmem [shape: bf16[128,128], index: 3, kind: input, shape index: {}]
  %s4 = inlined_call_operand.vmem [shape: f32[128,128], index: 4, kind: input, shape index: {}]
  %s5 = inlined_call_operand.vmem [shape: f32[128,128], index: 5, kind: input, shape index: {}]
  %s6 = inlined_call_operand.vmem [shape: f32[1,128], index: 6, kind: input, shape index: {}]
  %s7 = inlined_call_operand.vmem [shape: f32[128,128], index: 7, kind: input, shape index: {}]
  %s8 = inlined_call_operand.vmem [shape: f32[128,128], index: 8, kind: input, shape index: {}]
  %s9 = inlined_call_operand.vmem [shape: f32[1,128], index: 9, kind: input, shape index: {}]
  %s10 = inlined_call_operand.vmem [shape: f32[128,128], index: 10, kind: output, shape index: {}]
  %s11 = sld [smem:[#allocation0]]
  $region81: #{forward.1} parent=0
    _
  %s13 = ssub.s32 1, %s11
  %s14 = scalar_select 0, %s13, %s11
  loop: start=0, step=1, limit=4
  $region2: #{forward.1} parent=0 // loop_pre_header
    _
  $region3: #{forward.1} parent=0 // loop_header
    %s16 = sphi 0, %s20
    %p17 = scmp.ge.s32.totalorder %s16, 4
    %s23 = sphi 0, %s35
    %s24 = sphi 0, %s31
    %s25 = sphi 0, %s23
    %s26 = sphi 0, %s24
    %s27 = sphi 0, %s25
    %s28 = sphi 0, %s26
    %s42 = sphi 0, %s44
    %s45 = sphi 0, %s42
    %s46 = sphi 0, %s45
    %s62 = sphi 0, %s46
    %s70 = sphi 0, %s72
    %s73 = sphi 0, %s70
    %s74 = sphi 0, %s73
    %s90 = sphi 0, %s74
    %s94 = sphi 0, %s94
    %s96 = sphi 0, %s94
    %s97 = sphi 0, %s96
    %s111 = sphi 0, %s97
    %s121 = sphi 0, %s123
    %s124 = sphi 0, %s121
    %s125 = sphi 0, %s124
    %s141 = sphi 0, %s125
    %s145 = sphi 0, %s145
    %s147 = sphi 0, %s145
    %s148 = sphi 0, %s147
    %s162 = sphi 0, %s148
    %s166 = sphi 0, %s166
    %s168 = sphi 0, %s166
    %s169 = sphi 0, %s168
    %s183 = sphi 0, %s169
    %s187 = sphi 0, %s187
    %s189 = sphi 0, %s187
    %s190 = sphi 0, %s189
    %s204 = sphi 0, %s190
    %s208 = sphi 0, %s208
    %s210 = sphi 0, %s208
    %s211 = sphi 0, %s210
    %s225 = sphi 0, %s211
    %s229 = sphi 0, %s229
    %s231 = sphi 0, %s229
    %s232 = sphi 0, %s231
    %s246 = sphi 0, %s232
    %s250 = sphi 0, %s250
    %s252 = sphi 0, %s250
    %s253 = sphi 0, %s252
    %s267 = sphi 0, %s253
    %s275 = sphi 0, %s277
    %s278 = sphi 0, %s275
    %s279 = sphi 0, %s278
    %s295 = sphi 0, %s279
  $region4: #{forward.1} parent=0 // loop_header_branch
    %19 = sbr.rel (%p17) target = $region8
  $region5: #{forward.1} parent=0 // loop_body
    %s21 = ssub.s32 %s16, 1
    %s22 = ssub.s32 %s16, 2
    %s29 = sadd.s32 1, %s24
    %p30 = scmp.ge.s32.totalorder %s29, 1
    %s31 = scalar_select %p30, 0, %s29
    %s32 = sadd.s32 1, %s23
    %s33 = scalar_select %p30, %s32, %s23
    %p34 = scmp.ge.s32.totalorder %s33, 2
    %s35 = scalar_select %p34, 0, %s33
    %s36 = ssub.s32 1, %s23
    %s37 = smul.u32 %s24, %s36
    %s38 = ssub.s32 1, %s35
    %s39 = smul.u32 %s31, %s38
    %s40 = ssub.s32 %s37, %s39
    %p41 = scmp.eq.s32.totalorder %s40, 0
    %s43 = sadd.s32 %s42, 1
    %s44 = scalar_select %p41, %s42, %s43
    %p47 = pneg %p41
    %p48 = scmp.eq.s32.totalorder %s16, 1
    %p49 = por %p47, %p48
    %p50 = scmp.ne.s32.totalorder %s42, %s45
    %p51 = scmp.eq.s32.totalorder %s16, 0
    %p52 = por %p50, %p51
    %p53 = scmp.ne.s32.totalorder %s42, %s45
    %p54 = scmp.eq.s32.totalorder %s21, 1
    %p55 = por %p53, %p54
    %p56 = scmp.ne.s32.totalorder %s45, %s46
    %p57 = scmp.eq.s32.totalorder %s21, 0
    %p58 = por %p56, %p57
    %p59 = scmp.ne.s32.totalorder %s45, %s46
    %p60 = scmp.eq.s32.totalorder %s22, 1
    %p61 = por %p59, %p60
    %p63 = scmp.ne.s32.totalorder %s46, %s62
    %p64 = scmp.eq.s32.totalorder %s22, 0
    %p65 = por %p63, %p64
    %s66 = smul.u32 %s24, %s23
    %s67 = smul.u32 %s31, %s35
    %s68 = ssub.s32 %s66, %s67
    %p69 = scmp.eq.s32.totalorder %s68, 0
    %s71 = sadd.s32 %s70, 1
    %s72 = scalar_select %p69, %s70, %s71
    %p75 = pneg %p69
    %p76 = scmp.eq.s32.totalorder %s16, 1
    %p77 = por %p75, %p76
    %p78 = scmp.ne.s32.totalorder %s70, %s73
    %p79 = scmp.eq.s32.totalorder %s16, 0
    %p80 = por %p78, %p79
    %p81 = scmp.ne.s32.totalorder %s70, %s73
    %p82 = scmp.eq.s32.totalorder %s21, 1
    %p83 = por %p81, %p82
    %p84 = scmp.ne.s32.totalorder %s73, %s74
    %p85 = scmp.eq.s32.totalorder %s21, 0
    %p86 = por %p84, %p85
    %p87 = scmp.ne.s32.totalorder %s73, %s74
    %p88 = scmp.eq.s32.totalorder %s22, 1
    %p89 = por %p87, %p88
    %p91 = scmp.ne.s32.totalorder %s74, %s90
    %p92 = scmp.eq.s32.totalorder %s22, 0
    %p93 = por %p91, %p92
    %s95 = sadd.s32 %s94, 1
    %p98 = scmp.eq.s32.totalorder %s16, 1
    %p99 = scmp.ne.s32.totalorder %s94, %s96
    %p100 = scmp.eq.s32.totalorder %s16, 0
    %p101 = por %p99, %p100
    %p102 = scmp.ne.s32.totalorder %s94, %s96
    %p103 = scmp.eq.s32.totalorder %s21, 1
    %p104 = por %p102, %p103
    %p105 = scmp.ne.s32.totalorder %s96, %s97
    %p106 = scmp.eq.s32.totalorder %s21, 0
    %p107 = por %p105, %p106
    %p108 = scmp.ne.s32.totalorder %s96, %s97
    %p109 = scmp.eq.s32.totalorder %s22, 1
    %p110 = por %p108, %p109
    %p112 = scmp.ne.s32.totalorder %s97, %s111
    %p113 = scmp.eq.s32.totalorder %s22, 0
    %p114 = por %p112, %p113
    %s115 = ssub.s32 1, %s23
    %s116 = smul.u32 %s24, %s115
    %s117 = ssub.s32 1, %s35
    %s118 = smul.u32 %s31, %s117
    %s119 = ssub.s32 %s116, %s118
    %p120 = scmp.eq.s32.totalorder %s119, 0
    %s122 = sadd.s32 %s121, 1
    %s123 = scalar_select %p120, %s121, %s122
    %p126 = pneg %p120
    %p127 = scmp.eq.s32.totalorder %s16, 1
    %p128 = por %p126, %p127
    %p129 = scmp.ne.s32.totalorder %s121, %s124
    %p130 = scmp.eq.s32.totalorder %s16, 0
    %p131 = por %p129, %p130
    %p132 = scmp.ne.s32.totalorder %s121, %s124
    %p133 = scmp.eq.s32.totalorder %s21, 1
    %p134 = por %p132, %p133
    %p135 = scmp.ne.s32.totalorder %s124, %s125
    %p136 = scmp.eq.s32.totalorder %s21, 0
    %p137 = por %p135, %p136
    %p138 = scmp.ne.s32.totalorder %s124, %s125
    %p139 = scmp.eq.s32.totalorder %s22, 1
    %p140 = por %p138, %p139
    %p142 = scmp.ne.s32.totalorder %s125, %s141
    %p143 = scmp.eq.s32.totalorder %s22, 0
    %p144 = por %p142, %p143
    %s146 = sadd.s32 %s145, 1
    %p149 = scmp.eq.s32.totalorder %s16, 1
    %p150 = scmp.ne.s32.totalorder %s145, %s147
    %p151 = scmp.eq.s32.totalorder %s16, 0
    %p152 = por %p150, %p151
    %p153 = scmp.ne.s32.totalorder %s145, %s147
    %p154 = scmp.eq.s32.totalorder %s21, 1
    %p155 = por %p153, %p154
    %p156 = scmp.ne.s32.totalorder %s147, %s148
    %p157 = scmp.eq.s32.totalorder %s21, 0
    %p158 = por %p156, %p157
    %p159 = scmp.ne.s32.totalorder %s147, %s148
    %p160 = scmp.eq.s32.totalorder %s22, 1
    %p161 = por %p159, %p160
    %p163 = scmp.ne.s32.totalorder %s148, %s162
    %p164 = scmp.eq.s32.totalorder %s22, 0
    %p165 = por %p163, %p164
    %s167 = sadd.s32 %s166, 1
    %p170 = scmp.eq.s32.totalorder %s16, 1
    %p171 = scmp.ne.s32.totalorder %s166, %s168
    %p172 = scmp.eq.s32.totalorder %s16, 0
    %p173 = por %p171, %p172
    %p174 = scmp.ne.s32.totalorder %s166, %s168
    %p175 = scmp.eq.s32.totalorder %s21, 1
    %p176 = por %p174, %p175
    %p177 = scmp.ne.s32.totalorder %s168, %s169
    %p178 = scmp.eq.s32.totalorder %s21, 0
    %p179 = por %p177, %p178
    %p180 = scmp.ne.s32.totalorder %s168, %s169
    %p181 = scmp.eq.s32.totalorder %s22, 1
    %p182 = por %p180, %p181
    %p184 = scmp.ne.s32.totalorder %s169, %s183
    %p185 = scmp.eq.s32.totalorder %s22, 0
    %p186 = por %p184, %p185
    %s188 = sadd.s32 %s187, 1
    %p191 = scmp.eq.s32.totalorder %s16, 1
    %p192 = scmp.ne.s32.totalorder %s187, %s189
    %p193 = scmp.eq.s32.totalorder %s16, 0
    %p194 = por %p192, %p193
    %p195 = scmp.ne.s32.totalorder %s187, %s189
    %p196 = scmp.eq.s32.totalorder %s21, 1
    %p197 = por %p195, %p196
    %p198 = scmp.ne.s32.totalorder %s189, %s190
    %p199 = scmp.eq.s32.totalorder %s21, 0
    %p200 = por %p198, %p199
    %p201 = scmp.ne.s32.totalorder %s189, %s190
    %p202 = scmp.eq.s32.totalorder %s22, 1
    %p203 = por %p201, %p202
    %p205 = scmp.ne.s32.totalorder %s190, %s204
    %p206 = scmp.eq.s32.totalorder %s22, 0
    %p207 = por %p205, %p206
    %s209 = sadd.s32 %s208, 1
    %p212 = scmp.eq.s32.totalorder %s16, 1
    %p213 = scmp.ne.s32.totalorder %s208, %s210
    %p214 = scmp.eq.s32.totalorder %s16, 0
    %p215 = por %p213, %p214
    %p216 = scmp.ne.s32.totalorder %s208, %s210
    %p217 = scmp.eq.s32.totalorder %s21, 1
    %p218 = por %p216, %p217
    %p219 = scmp.ne.s32.totalorder %s210, %s211
    %p220 = scmp.eq.s32.totalorder %s21, 0
    %p221 = por %p219, %p220
    %p222 = scmp.ne.s32.totalorder %s210, %s211
    %p223 = scmp.eq.s32.totalorder %s22, 1
    %p224 = por %p222, %p223
    %p226 = scmp.ne.s32.totalorder %s211, %s225
    %p227 = scmp.eq.s32.totalorder %s22, 0
    %p228 = por %p226, %p227
    %s230 = sadd.s32 %s229, 1
    %p233 = scmp.eq.s32.totalorder %s16, 1
    %p234 = scmp.ne.s32.totalorder %s229, %s231
    %p235 = scmp.eq.s32.totalorder %s16, 0
    %p236 = por %p234, %p235
    %p237 = scmp.ne.s32.totalorder %s229, %s231
    %p238 = scmp.eq.s32.totalorder %s21, 1
    %p239 = por %p237, %p238
    %p240 = scmp.ne.s32.totalorder %s231, %s232
    %p241 = scmp.eq.s32.totalorder %s21, 0
    %p242 = por %p240, %p241
    %p243 = scmp.ne.s32.totalorder %s231, %s232
    %p244 = scmp.eq.s32.totalorder %s22, 1
    %p245 = por %p243, %p244
    %p247 = scmp.ne.s32.totalorder %s232, %s246
    %p248 = scmp.eq.s32.totalorder %s22, 0
    %p249 = por %p247, %p248
    %s251 = sadd.s32 %s250, 1
    %p254 = scmp.eq.s32.totalorder %s16, 1
    %p255 = scmp.ne.s32.totalorder %s250, %s252
    %p256 = scmp.eq.s32.totalorder %s16, 0
    %p257 = por %p255, %p256
    %p258 = scmp.ne.s32.totalorder %s250, %s252
    %p259 = scmp.eq.s32.totalorder %s21, 1
    %p260 = por %p258, %p259
    %p261 = scmp.ne.s32.totalorder %s252, %s253
    %p262 = scmp.eq.s32.totalorder %s21, 0
    %p263 = por %p261, %p262
    %p264 = scmp.ne.s32.totalorder %s252, %s253
    %p265 = scmp.eq.s32.totalorder %s22, 1
    %p266 = por %p264, %p265
    %p268 = scmp.ne.s32.totalorder %s253, %s267
    %p269 = scmp.eq.s32.totalorder %s22, 0
    %p270 = por %p268, %p269
    %s271 = smul.u32 %s24, %s23
    %s272 = smul.u32 %s31, %s35
    %s273 = ssub.s32 %s271, %s272
    %p274 = scmp.eq.s32.totalorder %s273, 0
    %s276 = sadd.s32 %s275, 1
    %s277 = scalar_select %p274, %s275, %s276
    %p280 = pneg %p274
    %p281 = scmp.eq.s32.totalorder %s16, 1
    %p282 = por %p280, %p281
    %p283 = scmp.ne.s32.totalorder %s275, %s278
    %p284 = scmp.eq.s32.totalorder %s16, 0
    %p285 = por %p283, %p284
    %p286 = scmp.ne.s32.totalorder %s275, %s278
    %p287 = scmp.eq.s32.totalorder %s21, 1
    %p288 = por %p286, %p287
    %p289 = scmp.ne.s32.totalorder %s278, %s279
    %p290 = scmp.eq.s32.totalorder %s21, 0
    %p291 = por %p289, %p290
    %p292 = scmp.ne.s32.totalorder %s278, %s279
    %p293 = scmp.eq.s32.totalorder %s22, 1
    %p294 = por %p292, %p293
    %p296 = scmp.ne.s32.totalorder %s279, %s295
    %p297 = scmp.eq.s32.totalorder %s22, 0
    %p298 = por %p296, %p297
    %p299 = scmp.le.s32.totalorder 1, %s16
    %p300 = scmp.lt.s32.totalorder %s16, 3
    %p301 = pnand %p299, %p300
    %p302 = pneg %p301
    // Predicated region
    $region9: #{forward.1} parent=5 // pred_check
      _
    $region10: #{forward.1} parent=5 // pred_check_branch
      %304 = sbr.rel (%p301) target = $region12
    $region11: #{forward.1} parent=5 // pred_region
      %s305 = ssub.s32 %s16, 1
      // Predicated region
      $region13: #{forward.1} parent=11 // pred_check
        %p306 = pneg %p107
      $region14: #{forward.1} parent=11 // pred_check_branch
        %308 = sbr.rel (%p306) target = $region16
      $region15: #{forward.1} parent=11 // pred_region
        _
      $region16: #{forward.1} parent=11 // pred_fallthru
        _
      // Predicated region
      $region17: #{forward.1} parent=11 // pred_check
        %p309 = pneg %p158
      $region18: #{forward.1} parent=11 // pred_check_branch
        %311 = sbr.rel (%p309) target = $region20
      $region19: #{forward.1} parent=11 // pred_region
        _
      $region20: #{forward.1} parent=11 // pred_fallthru
        _
      // Predicated region
      $region21: #{forward.1} parent=11 // pred_check
        %p312 = pneg %p179
      $region22: #{forward.1} parent=11 // pred_check_branch
        %314 = sbr.rel (%p312) target = $region24
      $region23: #{forward.1} parent=11 // pred_region
        _
      $region24: #{forward.1} parent=11 // pred_fallthru
        _
      // Predicated region
      $region25: #{forward.1} parent=11 // pred_check
        %p315 = pneg %p200
      $region26: #{forward.1} parent=11 // pred_check_branch
        %317 = sbr.rel (%p315) target = $region28
      $region27: #{forward.1} parent=11 // pred_region
        _
      $region28: #{forward.1} parent=11 // pred_fallthru
        _
      // Predicated region
      $region29: #{forward.1} parent=11 // pred_check
        %p318 = pneg %p221
      $region30: #{forward.1} parent=11 // pred_check_branch
        %320 = sbr.rel (%p318) target = $region32
      $region31: #{forward.1} parent=11 // pred_region
        _
      $region32: #{forward.1} parent=11 // pred_fallthru
        _
      // Predicated region
      $region33: #{forward.1} parent=11 // pred_check
        %p321 = pneg %p242
      $region34: #{forward.1} parent=11 // pred_check_branch
        %323 = sbr.rel (%p321) target = $region36
      $region35: #{forward.1} parent=11 // pred_region
        _
      $region36: #{forward.1} parent=11 // pred_fallthru
        _
      // Predicated region
      $region37: #{forward.1} parent=11 // pred_check
        %p324 = pneg %p263
      $region38: #{forward.1} parent=11 // pred_check_branch
        %326 = sbr.rel (%p324) target = $region40
      $region39: #{forward.1} parent=11 // pred_region
        _
      $region40: #{forward.1} parent=11 // pred_fallthru
        _
    $region12: #{forward.1} parent=5 // pred_fallthru
      _
    %p327 = scmp.lt.s32.totalorder %s16, 2
    // Predicated region
    $region41: #{forward.1} parent=5 // pred_check
      %p328 = pneg %p327
    $region42: #{forward.1} parent=5 // pred_check_branch
      %330 = sbr.rel (%p328) target = $region44
    $region43: #{forward.1} parent=5 // pred_region
      // Predicated region
      $region45: #{forward.1} parent=43 // pred_check
        %p331 = pneg %p52
      $region46: #{forward.1} parent=43 // pred_check_branch
        %333 = sbr.rel (%p331) target = $region48
      $region47: #{forward.1} parent=43 // pred_region
        %s334 = ssub.s32 1, %s23
        %s335 = smul.u32 %s24, %s334
        %s336 = smul.u32 16, %s335
        %p337 = scmp.lt.s32.totalorder %s336, 15
        %s338 = scalar_select %p337, %s336, 15
        %s339 = smul.addr %s338, 4
        %s340 = scalar_lea.vmem %s0, %s339
        %s341 = ssub.s32 1, %s23
        %s342 = smul.u32 %s24, %s341
        %s343 = smul.u32 16, %s342
      $region48: #{forward.1} parent=43 // pred_fallthru
        _
      // Predicated region
      $region49: #{forward.1} parent=43 // pred_check
        %p344 = pneg %p80
      $region50: #{forward.1} parent=43 // pred_check_branch
        %346 = sbr.rel (%p344) target = $region52
      $region51: #{forward.1} parent=43 // pred_region
        %s347 = smul.u32 %s24, %s23
        %s348 = smul.u32 16, %s347
        %p349 = scmp.lt.s32.totalorder %s348, 15
        %s350 = scalar_select %p349, %s348, 15
        %s351 = smul.addr %s350, 4
        %s352 = scalar_lea.vmem %s1, %s351
        %s353 = smul.u32 %s24, %s23
        %s354 = smul.u32 16, %s353
      $region52: #{forward.1} parent=43 // pred_fallthru
        _
      // Predicated region
      $region53: #{forward.1} parent=43 // pred_check
        %p355 = pneg %p131
      $region54: #{forward.1} parent=43 // pred_check_branch
        %357 = sbr.rel (%p355) target = $region56
      $region55: #{forward.1} parent=43 // pred_region
        %s358 = ssub.s32 1, %s23
        %s359 = smul.u32 %s24, %s358
        %s360 = smul.u32 16, %s359
        %p361 = scmp.lt.s32.totalorder %s360, 15
        %s362 = scalar_select %p361, %s360, 15
        %s363 = smul.addr %s362, 4
        %s364 = scalar_lea.vmem %s3, %s363
        %s365 = ssub.s32 1, %s23
        %s366 = smul.u32 %s24, %s365
        %s367 = smul.u32 16, %s366
      $region56: #{forward.1} parent=43 // pred_fallthru
        _
    $region44: #{forward.1} parent=5 // pred_fallthru
      _
    %p368 = scmp.le.s32.totalorder 1, %s16
    %p369 = scmp.lt.s32.totalorder %s16, 3
    %p370 = pnand %p368, %p369
    %p371 = pneg %p370
    // Predicated region
    $region57: #{forward.1} parent=5 // pred_check
      _
    $region58: #{forward.1} parent=5 // pred_check_branch
      %373 = sbr.rel (%p370) target = $region60
    $region59: #{forward.1} parent=5 // pred_region
      %s374 = ssub.s32 %s16, 1
      %s375 = ssub.s32 1, %s25
      %s376 = smul.u32 %s26, %s375
      %s377 = smul.u32 16, %s376
      %p378 = scmp.lt.s32.totalorder %s377, 15
      %s379 = scalar_select %p378, %s377, 15
      %s380 = smul.addr %s379, 4
      %s381 = scalar_lea.vmem %s0, %s380
      %p382 = pneg %p58
      %p383 = pneg %p55
      %s384 = smul.u32 %s26, %s25
      %s385 = smul.u32 16, %s384
      %p386 = scmp.lt.s32.totalorder %s385, 15
      %s387 = scalar_select %p386, %s385, 15
      %s388 = smul.addr %s387, 4
      %s389 = scalar_lea.vmem %s1, %s388
      %p390 = pneg %p86
      %p391 = pneg %p83
      %p392 = pneg %p107
      %p393 = pneg %p104
      %s394 = ssub.s32 1, %s25
      %s395 = smul.u32 %s26, %s394
      %s396 = smul.u32 16, %s395
      %p397 = scmp.lt.s32.totalorder %s396, 15
      %s398 = scalar_select %p397, %s396, 15
      %s399 = smul.addr %s398, 4
      %s400 = scalar_lea.vmem %s3, %s399
      %p401 = pneg %p137
      %p402 = pneg %p134
      %p403 = pneg %p158
      %p404 = pneg %p155
      %p405 = pneg %p179
      %p406 = pneg %p176
      %p407 = pneg %p200
      %p408 = pneg %p197
      %p409 = pneg %p221
      %p410 = pneg %p218
      %p411 = pneg %p242
      %p412 = pneg %p239
      %p413 = pneg %p263
      %p414 = pneg %p260
      %p415 = pneg %p291
      %p416 = pneg %p288
      %s417 = smul.u32 %s26, %s25
      %s418 = smul.u32 16, %s417
      %p419 = scmp.lt.s32.totalorder %s418, 15
      %s420 = scalar_select %p419, %s418, 15
      %s421 = smul.addr %s420, 8
      %s422 = scalar_lea.vmem %s10, %s421
      %s423 = ssub.s32 1, %s25
      %s424 = smul.u32 %s26, %s423
      %s425 = smul.u32 16, %s424
      %p426 = scmp.lt.s32.totalorder %s425, 15
      %s427 = scalar_select %p426, %s425, 15
      %s428 = smul.addr %s427, 4
      %s429 = scalar_lea.vmem %s0, %s428
      %s430 = ssub.s32 1, %s25
      %s431 = smul.u32 %s26, %s430
      %s432 = smul.u32 16, %s431
      %s433 = smul.u32 %s26, %s25
      %s434 = smul.u32 16, %s433
      %p435 = scmp.lt.s32.totalorder %s434, 15
      %s436 = scalar_select %p435, %s434, 15
      %s437 = smul.addr %s436, 4
      %s438 = scalar_lea.vmem %s1, %s437
      %s439 = smul.u32 %s26, %s25
      %s440 = smul.u32 16, %s439
      %s441 = ssub.s32 1, %s25
      %s442 = smul.u32 %s26, %s441
      %s443 = smul.u32 16, %s442
      %p444 = scmp.lt.s32.totalorder %s443, 15
      %s445 = scalar_select %p444, %s443, 15
      %s446 = smul.addr %s445, 4
      %s447 = scalar_lea.vmem %s3, %s446
      %s448 = ssub.s32 1, %s25
      %s449 = smul.u32 %s26, %s448
      %s450 = smul.u32 16, %s449
      %s451 = smul.u32 %s26, %s25
      %s452 = smul.u32 16, %s451
      %p453 = scmp.lt.s32.totalorder %s452, 15
      %s454 = scalar_select %p453, %s452, 15
      %s455 = smul.addr %s454, 8
      %s456 = scalar_lea.vmem %s10, %s455
      %s457 = smul.u32 %s26, %s25
      %s458 = smul.u32 16, %s457
      %s460 = smul.u32 %s26, 128
      %p461 = scmp.eq.s32.totalorder %s25, 0
      // Predicated region
      $region61: #{forward.1} parent=59 // pred_check
        %p462 = pneg %p461
      $region62: #{forward.1} parent=59 // pred_check_branch
        %464 = sbr.rel (%p462) target = $region64
      $region63: #{forward.1} parent=59 // pred_region
        %v465 = vld [vmem:[%s429] sm:$0xf]
        %v466 = vld [vmem:[%s429 + $0x4] sm:$0xf]
        %v467 = vld [vmem:[%s429 + $0x8] sm:$0xf]
        %v468 = vld [vmem:[%s429 + $0xc] sm:$0xf]
        %v469 = vld [vmem:[%s429 + $0x10] sm:$0xf]
        %v470 = vld [vmem:[%s429 + $0x14] sm:$0xf]
        %v471 = vld [vmem:[%s429 + $0x18] sm:$0xf]
        %v472 = vld [vmem:[%s429 + $0x1c] sm:$0xf]
        %v473 = vld [vmem:[%s429 + $0x20] sm:$0xf]
        %v474 = vld [vmem:[%s429 + $0x24] sm:$0xf]
        %v475 = vld [vmem:[%s429 + $0x28] sm:$0xf]
        %v476 = vld [vmem:[%s429 + $0x2c] sm:$0xf]
        %v477 = vld [vmem:[%s429 + $0x30] sm:$0xf]
        %v478 = vld [vmem:[%s429 + $0x34] sm:$0xf]
        %v479 = vld [vmem:[%s429 + $0x38] sm:$0xf]
        %v480 = vld [vmem:[%s429 + $0x3c] sm:$0xf]
        %v481 = vld [vmem:[%s2] sm:$0xff]
        %v482 = vld [vmem:[%s2 + $0x8] sm:$0xff]
        %v483 = vld [vmem:[%s2 + $0x10] sm:$0xff]
        %v484 = vld [vmem:[%s2 + $0x18] sm:$0xff]
        %v485 = vld [vmem:[%s2 + $0x20] sm:$0xff]
        %v486 = vld [vmem:[%s2 + $0x28] sm:$0xff]
        %v487 = vld [vmem:[%s2 + $0x30] sm:$0xff]
        %v488 = vld [vmem:[%s2 + $0x38] sm:$0xff]
        %v489 = vld [vmem:[%s2 + $0x40] sm:$0xff]
        %v490 = vld [vmem:[%s2 + $0x48] sm:$0xff]
        %v491 = vld [vmem:[%s2 + $0x50] sm:$0xff]
        %v492 = vld [vmem:[%s2 + $0x58] sm:$0xff]
        %v493 = vld [vmem:[%s2 + $0x60] sm:$0xff]
        %v494 = vld [vmem:[%s2 + $0x68] sm:$0xff]
        %v495 = vld [vmem:[%s2 + $0x70] sm:$0xff]
        %v496 = vld [vmem:[%s2 + $0x78] sm:$0xff]
        %v497 = vpack.c.bf16 %v482, %v481
        %v498 = vpack.c.bf16 %v484, %v483
        %v499 = vpack.c.bf16 %v486, %v485
        %v500 = vpack.c.bf16 %v488, %v487
        %v501 = vpack.c.bf16 %v490, %v489
        %v502 = vpack.c.bf16 %v492, %v491
        %v503 = vpack.c.bf16 %v494, %v493
        %v504 = vpack.c.bf16 %v496, %v495
        %v521 = vunpack.c.l.b16 %v465
        %v522 = vunpack.c.l.b16 %v466
        %v523 = vunpack.c.l.b16 %v467
        %v524 = vunpack.c.l.b16 %v468
        %v525 = vunpack.c.l.b16 %v469
        %v526 = vunpack.c.l.b16 %v470
        %v527 = vunpack.c.l.b16 %v471
        %v528 = vunpack.c.l.b16 %v472
        %v529 = vunpack.c.l.b16 %v473
        %v530 = vunpack.c.l.b16 %v474
        %v531 = vunpack.c.l.b16 %v475
        %v532 = vunpack.c.l.b16 %v476
        %v533 = vunpack.c.l.b16 %v477
        %v534 = vunpack.c.l.b16 %v478
        %v535 = vunpack.c.l.b16 %v479
        %v536 = vunpack.c.l.b16 %v480
        %v537 = vpack.c.b16 %v522, %v521
        %v538 = vpack.c.b16 %v524, %v523
        %v539 = vpack.c.b16 %v526, %v525
        %v540 = vpack.c.b16 %v528, %v527
        %v541 = vpack.c.b16 %v530, %v529
        %v542 = vpack.c.b16 %v532, %v531
        %v543 = vpack.c.b16 %v534, %v533
        %v544 = vpack.c.b16 %v536, %v535
        %553 = vmatprep.subr.bf16.mxu0 0
        %554 = vmatpush1.bf16.msra.mxu0 %v504
        %555 = vmatprep.subr.bf16.mxu0 0
        %556 = vmatpush1.bf16.msra.mxu0 %v503
        %557 = vmatprep.subr.bf16.mxu0 0
        %558 = vmatpush1.bf16.msra.mxu0 %v502
        %559 = vmatprep.subr.bf16.mxu0 0
        %560 = vmatpush1.bf16.msra.mxu0 %v501
        %561 = vmatprep.subr.bf16.mxu0 0
        %562 = vmatpush1.bf16.msra.mxu0 %v500
        %563 = vmatprep.subr.bf16.mxu0 0
        %564 = vmatpush1.bf16.msra.mxu0 %v499
        %565 = vmatprep.subr.bf16.mxu0 0
        %566 = vmatpush1.bf16.msra.mxu0 %v498
        %567 = vmatprep.subr.bf16.mxu0 0
        %568 = vmatpush1.bf16.msra.mxu0 %v497
        %569 = vmatprep.subr.bf16.mxu0 0
        %570 = vmatpush2.bf16.msra.mxu0 0
        %571 = vmatprep.subr.bf16.mxu0 0
        %572 = vmatpush2.bf16.msra.mxu0 0
        %573 = vmatprep.subr.bf16.mxu0 0
        %574 = vmatpush2.bf16.msra.mxu0 0
        %575 = vmatprep.subr.bf16.mxu0 0
        %576 = vmatpush2.bf16.msra.mxu0 0
        %577 = vmatprep.subr.bf16.mxu0 0
        %578 = vmatpush2.bf16.msra.mxu0 0
        %579 = vmatprep.subr.bf16.mxu0 0
        %580 = vmatpush2.bf16.msra.mxu0 0
        %581 = vmatprep.subr.bf16.mxu0 0
        %582 = vmatpush2.bf16.msra.mxu0 0
        %583 = vmatprep.subr.bf16.mxu0 0
        %584 = vmatpush2.bf16.msra.mxu0 0
        %585 = vmatprep.mubr.bf16.mxu0 0
        %586 = vmatmul.mubr.bf16.gmra.mxu0 %v537
        %v587 = vpop.f32.mrf.mxu0
        %v588 = vadd.f32 0.0, %v587
        %v589 = vpop.f32.mrf.mxu0
        %v590 = vpop.f32.mrf.mxu0
        %v591 = vadd.f32 0.0, %v590
        %v592 = vpop.f32.mrf.mxu0
        %593 = vmatprep.mubr.bf16.mxu0 0
        %594 = vmatmul.mubr.bf16.gmra.mxu0 %v538
        %v595 = vpop.f32.mrf.mxu0
        %v596 = vadd.f32 0.0, %v595
        %v597 = vpop.f32.mrf.mxu0
        %v598 = vpop.f32.mrf.mxu0
        %v599 = vadd.f32 0.0, %v598
        %v600 = vpop.f32.mrf.mxu0
        %601 = vmatprep.mubr.bf16.mxu0 0
        %602 = vmatmul.mubr.bf16.gmra.mxu0 %v539
        %v603 = vpop.f32.mrf.mxu0
        %v604 = vadd.f32 0.0, %v603
        %v605 = vpop.f32.mrf.mxu0
        %v606 = vpop.f32.mrf.mxu0
        %v607 = vadd.f32 0.0, %v606
        %v608 = vpop.f32.mrf.mxu0
        %609 = vmatprep.mubr.bf16.mxu0 0
        %610 = vmatmul.mubr.bf16.gmra.mxu0 %v540
        %v611 = vpop.f32.mrf.mxu0
        %v612 = vadd.f32 0.0, %v611
        %v613 = vpop.f32.mrf.mxu0
        %v614 = vpop.f32.mrf.mxu0
        %v615 = vadd.f32 0.0, %v614
        %v616 = vpop.f32.mrf.mxu0
        %617 = vmatprep.mubr.bf16.mxu0 0
        %618 = vmatmul.mubr.bf16.gmra.mxu0 %v541
        %v619 = vpop.f32.mrf.mxu0
        %v620 = vadd.f32 0.0, %v619
        %v621 = vpop.f32.mrf.mxu0
        %v622 = vpop.f32.mrf.mxu0
        %v623 = vadd.f32 0.0, %v622
        %v624 = vpop.f32.mrf.mxu0
        %625 = vmatprep.mubr.bf16.mxu0 0
        %626 = vmatmul.mubr.bf16.gmra.mxu0 %v542
        %v627 = vpop.f32.mrf.mxu0
        %v628 = vadd.f32 0.0, %v627
        %v629 = vpop.f32.mrf.mxu0
        %v630 = vpop.f32.mrf.mxu0
        %v631 = vadd.f32 0.0, %v630
        %v632 = vpop.f32.mrf.mxu0
        %633 = vmatprep.mubr.bf16.mxu0 0
        %634 = vmatmul.mubr.bf16.gmra.mxu0 %v543
        %v635 = vpop.f32.mrf.mxu0
        %v636 = vadd.f32 0.0, %v635
        %v637 = vpop.f32.mrf.mxu0
        %v638 = vpop.f32.mrf.mxu0
        %v639 = vadd.f32 0.0, %v638
        %v640 = vpop.f32.mrf.mxu0
        %641 = vmatprep.mubr.bf16.mxu0 0
        %642 = vmatmul.mubr.bf16.gmra.mxu0 %v544
        %v643 = vpop.f32.mrf.mxu0
        %v644 = vadd.f32 0.0, %v643
        %v645 = vpop.f32.mrf.mxu0
        %v646 = vpop.f32.mrf.mxu0
        %v647 = vadd.f32 0.0, %v646
        %v648 = vpop.f32.mrf.mxu0
        %649 = vdwg.mxu0
        %v650 = vmax.f32 %v588, 1.0
        %v651 = vmax.f32 %v591, 1.0
        %v652 = vmax.f32 %v596, 1.0
        %v653 = vmax.f32 %v599, 1.0
        %v654 = vmax.f32 %v604, 1.0
        %v655 = vmax.f32 %v607, 1.0
        %v656 = vmax.f32 %v612, 1.0
        %v657 = vmax.f32 %v615, 1.0
        %v658 = vmax.f32 %v620, 1.0
        %v659 = vmax.f32 %v623, 1.0
        %v660 = vmax.f32 %v628, 1.0
        %v661 = vmax.f32 %v631, 1.0
        %v662 = vmax.f32 %v636, 1.0
        %v663 = vmax.f32 %v639, 1.0
        %v664 = vmax.f32 %v644, 1.0
        %v665 = vmax.f32 %v647, 1.0
        %v666 = vrcp.pop %v650
        %v667 = vrcp.pop %v651
        %v668 = vrcp.pop %v652
        %v669 = vrcp.pop %v653
        %v670 = vrcp.pop %v654
        %v671 = vrcp.pop %v655
        %v672 = vrcp.pop %v656
        %v673 = vrcp.pop %v657
        %v674 = vrcp.pop %v658
        %v675 = vrcp.pop %v659
        %v676 = vrcp.pop %v660
        %v677 = vrcp.pop %v661
        %v678 = vrcp.pop %v662
        %v679 = vrcp.pop %v663
        %v680 = vrcp.pop %v664
        %v681 = vrcp.pop %v665
        %683 = vset.pattern.permute.xlu0 8
        %684 = vperm.xlu0 %683, %v666
        %v685 = vpop.permute.xlu0 %684
        %688 = vset.pattern.permute.xlu0 8
        %689 = vperm.xlu0 %688, %v667
        %v690 = vpop.permute.xlu0 %689
        %693 = vset.pattern.permute.xlu0 8
        %694 = vperm.xlu0 %693, %v668
        %v695 = vpop.permute.xlu0 %694
        %698 = vset.pattern.permute.xlu0 8
        %699 = vperm.xlu0 %698, %v669
        %v700 = vpop.permute.xlu0 %699
        %703 = vset.pattern.permute.xlu0 8
        %704 = vperm.xlu0 %703, %v670
        %v705 = vpop.permute.xlu0 %704
        %708 = vset.pattern.permute.xlu0 8
        %709 = vperm.xlu0 %708, %v671
        %v710 = vpop.permute.xlu0 %709
        %713 = vset.pattern.permute.xlu0 8
        %714 = vperm.xlu0 %713, %v672
        %v715 = vpop.permute.xlu0 %714
        %718 = vset.pattern.permute.xlu0 8
        %719 = vperm.xlu0 %718, %v673
        %v720 = vpop.permute.xlu0 %719
        %723 = vset.pattern.permute.xlu0 8
        %724 = vperm.xlu0 %723, %v674
        %v725 = vpop.permute.xlu0 %724
        %728 = vset.pattern.permute.xlu0 8
        %729 = vperm.xlu0 %728, %v675
        %v730 = vpop.permute.xlu0 %729
        %733 = vset.pattern.permute.xlu0 8
        %734 = vperm.xlu0 %733, %v676
        %v735 = vpop.permute.xlu0 %734
        %738 = vset.pattern.permute.xlu0 8
        %739 = vperm.xlu0 %738, %v677
        %v740 = vpop.permute.xlu0 %739
        %743 = vset.pattern.permute.xlu0 8
        %744 = vperm.xlu0 %743, %v678
        %v745 = vpop.permute.xlu0 %744
        %748 = vset.pattern.permute.xlu0 8
        %749 = vperm.xlu0 %748, %v679
        %v750 = vpop.permute.xlu0 %749
        %753 = vset.pattern.permute.xlu0 8
        %754 = vperm.xlu0 %753, %v680
        %v755 = vpop.permute.xlu0 %754
        %758 = vset.pattern.permute.xlu0 8
        %759 = vperm.xlu0 %758, %v681
        %v760 = vpop.permute.xlu0 %759
        %v762 = vmul.f32 %v588, %v685
        %v763 = vmul.f32 %v591, %v690
        %v764 = vmul.f32 %v596, %v695
        %v765 = vmul.f32 %v599, %v700
        %v766 = vmul.f32 %v604, %v705
        %v767 = vmul.f32 %v607, %v710
        %v768 = vmul.f32 %v612, %v715
        %v769 = vmul.f32 %v615, %v720
        %v770 = vmul.f32 %v620, %v725
        %v771 = vmul.f32 %v623, %v730
        %v772 = vmul.f32 %v628, %v735
        %v773 = vmul.f32 %v631, %v740
        %v774 = vmul.f32 %v636, %v745
        %v775 = vmul.f32 %v639, %v750
        %v776 = vmul.f32 %v644, %v755
        %v777 = vmul.f32 %v647, %v760
        %s778 = scalar_lea.vmem %s2, %s460
        %v779 = vld [vmem:[%s778] sm:$0xff]
        %v780 = vld [vmem:[%s778 + $0x8] sm:$0xff]
        %v781 = vld [vmem:[%s778 + $0x10] sm:$0xff]
        %v782 = vld [vmem:[%s778 + $0x18] sm:$0xff]
        %v783 = vld [vmem:[%s778 + $0x20] sm:$0xff]
        %v784 = vld [vmem:[%s778 + $0x28] sm:$0xff]
        %v785 = vld [vmem:[%s778 + $0x30] sm:$0xff]
        %v786 = vld [vmem:[%s778 + $0x38] sm:$0xff]
        %v787 = vld [vmem:[%s778 + $0x40] sm:$0xff]
        %v788 = vld [vmem:[%s778 + $0x48] sm:$0xff]
        %v789 = vld [vmem:[%s778 + $0x50] sm:$0xff]
        %v790 = vld [vmem:[%s778 + $0x58] sm:$0xff]
        %v791 = vld [vmem:[%s778 + $0x60] sm:$0xff]
        %v792 = vld [vmem:[%s778 + $0x68] sm:$0xff]
        %v793 = vld [vmem:[%s778 + $0x70] sm:$0xff]
        %v794 = vld [vmem:[%s778 + $0x78] sm:$0xff]
        %v795 = vld [vmem:[%s4] sm:$0xff]
        %v796 = vld [vmem:[%s4 + $0x8] sm:$0xff]
        %v797 = vld [vmem:[%s4 + $0x10] sm:$0xff]
        %v798 = vld [vmem:[%s4 + $0x18] sm:$0xff]
        %v799 = vld [vmem:[%s4 + $0x20] sm:$0xff]
        %v800 = vld [vmem:[%s4 + $0x28] sm:$0xff]
        %v801 = vld [vmem:[%s4 + $0x30] sm:$0xff]
        %v802 = vld [vmem:[%s4 + $0x38] sm:$0xff]
        %v803 = vld [vmem:[%s4 + $0x40] sm:$0xff]
        %v804 = vld [vmem:[%s4 + $0x48] sm:$0xff]
        %v805 = vld [vmem:[%s4 + $0x50] sm:$0xff]
        %v806 = vld [vmem:[%s4 + $0x58] sm:$0xff]
        %v807 = vld [vmem:[%s4 + $0x60] sm:$0xff]
        %v808 = vld [vmem:[%s4 + $0x68] sm:$0xff]
        %v809 = vld [vmem:[%s4 + $0x70] sm:$0xff]
        %v810 = vld [vmem:[%s4 + $0x78] sm:$0xff]
        %v811 = vld [vmem:[%s5] sm:$0xff]
        %v812 = vld [vmem:[%s5 + $0x8] sm:$0xff]
        %v813 = vld [vmem:[%s5 + $0x10] sm:$0xff]
        %v814 = vld [vmem:[%s5 + $0x18] sm:$0xff]
        %v815 = vld [vmem:[%s5 + $0x20] sm:$0xff]
        %v816 = vld [vmem:[%s5 + $0x28] sm:$0xff]
        %v817 = vld [vmem:[%s5 + $0x30] sm:$0xff]
        %v818 = vld [vmem:[%s5 + $0x38] sm:$0xff]
        %v819 = vld [vmem:[%s5 + $0x40] sm:$0xff]
        %v820 = vld [vmem:[%s5 + $0x48] sm:$0xff]
        %v821 = vld [vmem:[%s5 + $0x50] sm:$0xff]
        %v822 = vld [vmem:[%s5 + $0x58] sm:$0xff]
        %v823 = vld [vmem:[%s5 + $0x60] sm:$0xff]
        %v824 = vld [vmem:[%s5 + $0x68] sm:$0xff]
        %v825 = vld [vmem:[%s5 + $0x70] sm:$0xff]
        %v826 = vld [vmem:[%s5 + $0x78] sm:$0xff]
        %827 = vmatprep.subr.mxu0 0.0
        %828 = vmatpush1.msra.mxu0 %v826
        %829 = vmatprep.subr.mxu0 0.0
        %830 = vmatpush1.msra.mxu0 %v825
        %831 = vmatprep.subr.mxu0 0.0
        %832 = vmatpush1.msra.mxu0 %v824
        %833 = vmatprep.subr.mxu0 0.0
        %834 = vmatpush1.msra.mxu0 %v823
        %835 = vmatprep.subr.mxu0 0.0
        %836 = vmatpush1.msra.mxu0 %v822
        %837 = vmatprep.subr.mxu0 0.0
        %838 = vmatpush1.msra.mxu0 %v821
        %839 = vmatprep.subr.mxu0 0.0
        %840 = vmatpush1.msra.mxu0 %v820
        %841 = vmatprep.subr.mxu0 0.0
        %842 = vmatpush1.msra.mxu0 %v819
        %843 = vmatprep.subr.mxu0 0.0
        %844 = vmatpush1.msra.mxu0 %v818
        %845 = vmatprep.subr.mxu0 0.0
        %846 = vmatpush1.msra.mxu0 %v817
        %847 = vmatprep.subr.mxu0 0.0
        %848 = vmatpush1.msra.mxu0 %v816
        %849 = vmatprep.subr.mxu0 0.0
        %850 = vmatpush1.msra.mxu0 %v815
        %851 = vmatprep.subr.mxu0 0.0
        %852 = vmatpush1.msra.mxu0 %v814
        %853 = vmatprep.subr.mxu0 0.0
        %854 = vmatpush1.msra.mxu0 %v813
        %855 = vmatprep.subr.mxu0 0.0
        %856 = vmatpush1.msra.mxu0 %v812
        %857 = vmatprep.subr.mxu0 0.0
        %858 = vmatpush1.msra.mxu0 %v811
        %859 = vmatprep.subr.mxu0 0.0
        %860 = vmatpush2.msra.mxu0 0.0
        %861 = vmatprep.subr.mxu0 0.0
        %862 = vmatpush2.msra.mxu0 0.0
        %863 = vmatprep.subr.mxu0 0.0
        %864 = vmatpush2.msra.mxu0 0.0
        %865 = vmatprep.subr.mxu0 0.0
        %866 = vmatpush2.msra.mxu0 0.0
        %867 = vmatprep.subr.mxu0 0.0
        %868 = vmatpush2.msra.mxu0 0.0
        %869 = vmatprep.subr.mxu0 0.0
        %870 = vmatpush2.msra.mxu0 0.0
        %871 = vmatprep.subr.mxu0 0.0
        %872 = vmatpush2.msra.mxu0 0.0
        %873 = vmatprep.subr.mxu0 0.0
        %874 = vmatpush2.msra.mxu0 0.0
        %875 = vmatprep.subr.mxu0 0.0
        %876 = vmatpush2.msra.mxu0 0.0
        %877 = vmatprep.subr.mxu0 0.0
        %878 = vmatpush2.msra.mxu0 0.0
        %879 = vmatprep.subr.mxu0 0.0
        %880 = vmatpush2.msra.mxu0 0.0
        %881 = vmatprep.subr.mxu0 0.0
        %882 = vmatpush2.msra.mxu0 0.0
        %883 = vmatprep.subr.mxu0 0.0
        %884 = vmatpush2.msra.mxu0 0.0
        %885 = vmatprep.subr.mxu0 0.0
        %886 = vmatpush2.msra.mxu0 0.0
        %887 = vmatprep.subr.mxu0 0.0
        %888 = vmatpush2.msra.mxu0 0.0
        %889 = vmatprep.subr.mxu0 0.0
        %890 = vmatpush2.msra.mxu0 0.0
        %891 = vmatprep.mubr.f32.mxu0 0.0
        %892 = vmatmul.mubr.f32.gmra.mxu0 %v779
        %v893 = vpop.f32.mrf.mxu0
        %v894 = vadd.f32 0.0, %v893
        %v895 = vpop.f32.mrf.mxu0
        %896 = vmatprep.mubr.f32.mxu0 0.0
        %897 = vmatmul.mubr.f32.gmra.mxu0 %v780
        %v898 = vpop.f32.mrf.mxu0
        %v899 = vadd.f32 0.0, %v898
        %v900 = vpop.f32.mrf.mxu0
        %901 = vmatprep.mubr.f32.mxu0 0.0
        %902 = vmatmul.mubr.f32.gmra.mxu0 %v781
        %v903 = vpop.f32.mrf.mxu0
        %v904 = vadd.f32 0.0, %v903
        %v905 = vpop.f32.mrf.mxu0
        %906 = vmatprep.mubr.f32.mxu0 0.0
        %907 = vmatmul.mubr.f32.gmra.mxu0 %v782
        %v908 = vpop.f32.mrf.mxu0
        %v909 = vadd.f32 0.0, %v908
        %v910 = vpop.f32.mrf.mxu0
        %911 = vmatprep.mubr.f32.mxu0 0.0
        %912 = vmatmul.mubr.f32.gmra.mxu0 %v783
        %v913 = vpop.f32.mrf.mxu0
        %v914 = vadd.f32 0.0, %v913
        %v915 = vpop.f32.mrf.mxu0
        %916 = vmatprep.mubr.f32.mxu0 0.0
        %917 = vmatmul.mubr.f32.gmra.mxu0 %v784
        %v918 = vpop.f32.mrf.mxu0
        %v919 = vadd.f32 0.0, %v918
        %v920 = vpop.f32.mrf.mxu0
        %921 = vmatprep.mubr.f32.mxu0 0.0
        %922 = vmatmul.mubr.f32.gmra.mxu0 %v785
        %v923 = vpop.f32.mrf.mxu0
        %v924 = vadd.f32 0.0, %v923
        %v925 = vpop.f32.mrf.mxu0
        %926 = vmatprep.mubr.f32.mxu0 0.0
        %927 = vmatmul.mubr.f32.gmra.mxu0 %v786
        %v928 = vpop.f32.mrf.mxu0
        %v929 = vadd.f32 0.0, %v928
        %v930 = vpop.f32.mrf.mxu0
        %931 = vmatprep.mubr.f32.mxu0 0.0
        %932 = vmatmul.mubr.f32.gmra.mxu0 %v787
        %v933 = vpop.f32.mrf.mxu0
        %v934 = vadd.f32 0.0, %v933
        %v935 = vpop.f32.mrf.mxu0
        %936 = vmatprep.mubr.f32.mxu0 0.0
        %937 = vmatmul.mubr.f32.gmra.mxu0 %v788
        %v938 = vpop.f32.mrf.mxu0
        %v939 = vadd.f32 0.0, %v938
        %v940 = vpop.f32.mrf.mxu0
        %941 = vmatprep.mubr.f32.mxu0 0.0
        %942 = vmatmul.mubr.f32.gmra.mxu0 %v789
        %v943 = vpop.f32.mrf.mxu0
        %v944 = vadd.f32 0.0, %v943
        %v945 = vpop.f32.mrf.mxu0
        %946 = vmatprep.mubr.f32.mxu0 0.0
        %947 = vmatmul.mubr.f32.gmra.mxu0 %v790
        %v948 = vpop.f32.mrf.mxu0
        %v949 = vadd.f32 0.0, %v948
        %v950 = vpop.f32.mrf.mxu0
        %951 = vmatprep.mubr.f32.mxu0 0.0
        %952 = vmatmul.mubr.f32.gmra.mxu0 %v791
        %v953 = vpop.f32.mrf.mxu0
        %v954 = vadd.f32 0.0, %v953
        %v955 = vpop.f32.mrf.mxu0
        %956 = vmatprep.mubr.f32.mxu0 0.0
        %957 = vmatmul.mubr.f32.gmra.mxu0 %v792
        %v958 = vpop.f32.mrf.mxu0
        %v959 = vadd.f32 0.0, %v958
        %v960 = vpop.f32.mrf.mxu0
        %961 = vmatprep.mubr.f32.mxu0 0.0
        %962 = vmatmul.mubr.f32.gmra.mxu0 %v793
        %v963 = vpop.f32.mrf.mxu0
        %v964 = vadd.f32 0.0, %v963
        %v965 = vpop.f32.mrf.mxu0
        %966 = vmatprep.mubr.f32.mxu0 0.0
        %967 = vmatmul.mubr.f32.gmra.mxu0 %v794
        %v968 = vpop.f32.mrf.mxu0
        %v969 = vadd.f32 0.0, %v968
        %v970 = vpop.f32.mrf.mxu0
        %971 = vdwg.mxu0
        %972 = vmatprep.subr.mxu0 0.0
        %973 = vmatpush1.msra.mxu0 %v810
        %974 = vmatprep.subr.mxu0 0.0
        %975 = vmatpush1.msra.mxu0 %v809
        %976 = vmatprep.subr.mxu0 0.0
        %977 = vmatpush1.msra.mxu0 %v808
        %978 = vmatprep.subr.mxu0 0.0
        %979 = vmatpush1.msra.mxu0 %v807
        %980 = vmatprep.subr.mxu0 0.0
        %981 = vmatpush1.msra.mxu0 %v806
        %982 = vmatprep.subr.mxu0 0.0
        %983 = vmatpush1.msra.mxu0 %v805
        %984 = vmatprep.subr.mxu0 0.0
        %985 = vmatpush1.msra.mxu0 %v804
        %986 = vmatprep.subr.mxu0 0.0
        %987 = vmatpush1.msra.mxu0 %v803
        %988 = vmatprep.subr.mxu0 0.0
        %989 = vmatpush1.msra.mxu0 %v802
        %990 = vmatprep.subr.mxu0 0.0
        %991 = vmatpush1.msra.mxu0 %v801
        %992 = vmatprep.subr.mxu0 0.0
        %993 = vmatpush1.msra.mxu0 %v800
        %994 = vmatprep.subr.mxu0 0.0
        %995 = vmatpush1.msra.mxu0 %v799
        %996 = vmatprep.subr.mxu0 0.0
        %997 = vmatpush1.msra.mxu0 %v798
        %998 = vmatprep.subr.mxu0 0.0
        %999 = vmatpush1.msra.mxu0 %v797
        %1000 = vmatprep.subr.mxu0 0.0
        %1001 = vmatpush1.msra.mxu0 %v796
        %1002 = vmatprep.subr.mxu0 0.0
        %1003 = vmatpush1.msra.mxu0 %v795
        %1004 = vmatprep.subr.mxu0 0.0
        %1005 = vmatpush2.msra.mxu0 0.0
        %1006 = vmatprep.subr.mxu0 0.0
        %1007 = vmatpush2.msra.mxu0 0.0
        %1008 = vmatprep.subr.mxu0 0.0
        %1009 = vmatpush2.msra.mxu0 0.0
        %1010 = vmatprep.subr.mxu0 0.0
        %1011 = vmatpush2.msra.mxu0 0.0
        %1012 = vmatprep.subr.mxu0 0.0
        %1013 = vmatpush2.msra.mxu0 0.0
        %1014 = vmatprep.subr.mxu0 0.0
        %1015 = vmatpush2.msra.mxu0 0.0
        %1016 = vmatprep.subr.mxu0 0.0
        %1017 = vmatpush2.msra.mxu0 0.0
        %1018 = vmatprep.subr.mxu0 0.0
        %1019 = vmatpush2.msra.mxu0 0.0
        %1020 = vmatprep.subr.mxu0 0.0
        %1021 = vmatpush2.msra.mxu0 0.0
        %1022 = vmatprep.subr.mxu0 0.0
        %1023 = vmatpush2.msra.mxu0 0.0
        %1024 = vmatprep.subr.mxu0 0.0
        %1025 = vmatpush2.msra.mxu0 0.0
        %1026 = vmatprep.subr.mxu0 0.0
        %1027 = vmatpush2.msra.mxu0 0.0
        %1028 = vmatprep.subr.mxu0 0.0
        %1029 = vmatpush2.msra.mxu0 0.0
        %1030 = vmatprep.subr.mxu0 0.0
        %1031 = vmatpush2.msra.mxu0 0.0
        %1032 = vmatprep.subr.mxu0 0.0
        %1033 = vmatpush2.msra.mxu0 0.0
        %1034 = vmatprep.subr.mxu0 0.0
        %1035 = vmatpush2.msra.mxu0 0.0
        %1036 = vmatprep.mubr.f32.mxu0 0.0
        %1037 = vmatmul.mubr.f32.gmra.mxu0 %v762
        %v1038 = vpop.f32.mrf.mxu0
        %v1039 = vadd.f32 %v894, %v1038
        %v1040 = vpop.f32.mrf.mxu0
        %1041 = vmatprep.mubr.f32.mxu0 0.0
        %1042 = vmatmul.mubr.f32.gmra.mxu0 %v763
        %v1043 = vpop.f32.mrf.mxu0
        %v1044 = vadd.f32 %v899, %v1043
        %v1045 = vpop.f32.mrf.mxu0
        %1046 = vmatprep.mubr.f32.mxu0 0.0
        %1047 = vmatmul.mubr.f32.gmra.mxu0 %v764
        %v1048 = vpop.f32.mrf.mxu0
        %v1049 = vadd.f32 %v904, %v1048
        %v1050 = vpop.f32.mrf.mxu0
        %1051 = vmatprep.mubr.f32.mxu0 0.0
        %1052 = vmatmul.mubr.f32.gmra.mxu0 %v765
        %v1053 = vpop.f32.mrf.mxu0
        %v1054 = vadd.f32 %v909, %v1053
        %v1055 = vpop.f32.mrf.mxu0
        %1056 = vmatprep.mubr.f32.mxu0 0.0
        %1057 = vmatmul.mubr.f32.gmra.mxu0 %v766
        %v1058 = vpop.f32.mrf.mxu0
        %v1059 = vadd.f32 %v914, %v1058
        %v1060 = vpop.f32.mrf.mxu0
        %1061 = vmatprep.mubr.f32.mxu0 0.0
        %1062 = vmatmul.mubr.f32.gmra.mxu0 %v767
        %v1063 = vpop.f32.mrf.mxu0
        %v1064 = vadd.f32 %v919, %v1063
        %v1065 = vpop.f32.mrf.mxu0
        %1066 = vmatprep.mubr.f32.mxu0 0.0
        %1067 = vmatmul.mubr.f32.gmra.mxu0 %v768
        %v1068 = vpop.f32.mrf.mxu0
        %v1069 = vadd.f32 %v924, %v1068
        %v1070 = vpop.f32.mrf.mxu0
        %1071 = vmatprep.mubr.f32.mxu0 0.0
        %1072 = vmatmul.mubr.f32.gmra.mxu0 %v769
        %v1073 = vpop.f32.mrf.mxu0
        %v1074 = vadd.f32 %v929, %v1073
        %v1075 = vpop.f32.mrf.mxu0
        %1076 = vmatprep.mubr.f32.mxu0 0.0
        %1077 = vmatmul.mubr.f32.gmra.mxu0 %v770
        %v1078 = vpop.f32.mrf.mxu0
        %v1079 = vadd.f32 %v934, %v1078
        %v1080 = vpop.f32.mrf.mxu0
        %1081 = vmatprep.mubr.f32.mxu0 0.0
        %1082 = vmatmul.mubr.f32.gmra.mxu0 %v771
        %v1083 = vpop.f32.mrf.mxu0
        %v1084 = vadd.f32 %v939, %v1083
        %v1085 = vpop.f32.mrf.mxu0
        %1086 = vmatprep.mubr.f32.mxu0 0.0
        %1087 = vmatmul.mubr.f32.gmra.mxu0 %v772
        %v1088 = vpop.f32.mrf.mxu0
        %v1089 = vadd.f32 %v944, %v1088
        %v1090 = vpop.f32.mrf.mxu0
        %1091 = vmatprep.mubr.f32.mxu0 0.0
        %1092 = vmatmul.mubr.f32.gmra.mxu0 %v773
        %v1093 = vpop.f32.mrf.mxu0
        %v1094 = vadd.f32 %v949, %v1093
        %v1095 = vpop.f32.mrf.mxu0
        %1096 = vmatprep.mubr.f32.mxu0 0.0
        %1097 = vmatmul.mubr.f32.gmra.mxu0 %v774
        %v1098 = vpop.f32.mrf.mxu0
        %v1099 = vadd.f32 %v954, %v1098
        %v1100 = vpop.f32.mrf.mxu0
        %1101 = vmatprep.mubr.f32.mxu0 0.0
        %1102 = vmatmul.mubr.f32.gmra.mxu0 %v775
        %v1103 = vpop.f32.mrf.mxu0
        %v1104 = vadd.f32 %v959, %v1103
        %v1105 = vpop.f32.mrf.mxu0
        %1106 = vmatprep.mubr.f32.mxu0 0.0
        %1107 = vmatmul.mubr.f32.gmra.mxu0 %v776
        %v1108 = vpop.f32.mrf.mxu0
        %v1109 = vadd.f32 %v964, %v1108
        %v1110 = vpop.f32.mrf.mxu0
        %1111 = vmatprep.mubr.f32.mxu0 0.0
        %1112 = vmatmul.mubr.f32.gmra.mxu0 %v777
        %v1113 = vpop.f32.mrf.mxu0
        %v1114 = vadd.f32 %v969, %v1113
        %v1115 = vpop.f32.mrf.mxu0
        %1116 = vdwg.mxu0
        %v1117 = vld [vmem:[%s6] sm:$0x1]
        %v1119 = vlaneseq
        %v1120 = vshrl.u32 %v1119, 7
        %v1121 = vsub.s32 0, %v1120
        %v1122 = vrot.slane %v1117, %v1121
        %v1124 = vadd.f32 %v1039, %v1122
        %v1125 = vadd.f32 %v1044, %v1122
        %v1126 = vadd.f32 %v1049, %v1122
        %v1127 = vadd.f32 %v1054, %v1122
        %v1128 = vadd.f32 %v1059, %v1122
        %v1129 = vadd.f32 %v1064, %v1122
        %v1130 = vadd.f32 %v1069, %v1122
        %v1131 = vadd.f32 %v1074, %v1122
        %v1132 = vadd.f32 %v1079, %v1122
        %v1133 = vadd.f32 %v1084, %v1122
        %v1134 = vadd.f32 %v1089, %v1122
        %v1135 = vadd.f32 %v1094, %v1122
        %v1136 = vadd.f32 %v1099, %v1122
        %v1137 = vadd.f32 %v1104, %v1122
        %v1138 = vadd.f32 %v1109, %v1122
        %v1139 = vadd.f32 %v1114, %v1122
        %v1140 = vmax.f32 %v1124, 0.0
        %v1141 = vmax.f32 %v1125, 0.0
        %v1142 = vmax.f32 %v1126, 0.0
        %v1143 = vmax.f32 %v1127, 0.0
        %v1144 = vmax.f32 %v1128, 0.0
        %v1145 = vmax.f32 %v1129, 0.0
        %v1146 = vmax.f32 %v1130, 0.0
        %v1147 = vmax.f32 %v1131, 0.0
        %v1148 = vmax.f32 %v1132, 0.0
        %v1149 = vmax.f32 %v1133, 0.0
        %v1150 = vmax.f32 %v1134, 0.0
        %v1151 = vmax.f32 %v1135, 0.0
        %v1152 = vmax.f32 %v1136, 0.0
        %v1153 = vmax.f32 %v1137, 0.0
        %v1154 = vmax.f32 %v1138, 0.0
        %v1155 = vmax.f32 %v1139, 0.0
        %v1156 = vld [vmem:[%s447] sm:$0xf]
        %v1157 = vld [vmem:[%s447 + $0x4] sm:$0xf]
        %v1158 = vld [vmem:[%s447 + $0x8] sm:$0xf]
        %v1159 = vld [vmem:[%s447 + $0xc] sm:$0xf]
        %v1160 = vld [vmem:[%s447 + $0x10] sm:$0xf]
        %v1161 = vld [vmem:[%s447 + $0x14] sm:$0xf]
        %v1162 = vld [vmem:[%s447 + $0x18] sm:$0xf]
        %v1163 = vld [vmem:[%s447 + $0x1c] sm:$0xf]
        %v1164 = vld [vmem:[%s447 + $0x20] sm:$0xf]
        %v1165 = vld [vmem:[%s447 + $0x24] sm:$0xf]
        %v1166 = vld [vmem:[%s447 + $0x28] sm:$0xf]
        %v1167 = vld [vmem:[%s447 + $0x2c] sm:$0xf]
        %v1168 = vld [vmem:[%s447 + $0x30] sm:$0xf]
        %v1169 = vld [vmem:[%s447 + $0x34] sm:$0xf]
        %v1170 = vld [vmem:[%s447 + $0x38] sm:$0xf]
        %v1171 = vld [vmem:[%s447 + $0x3c] sm:$0xf]
        %v1172 = vunpack.c.l.bf16 %v1156
        %v1173 = vunpack.c.l.bf16 %v1157
        %v1174 = vunpack.c.l.bf16 %v1158
        %v1175 = vunpack.c.l.bf16 %v1159
        %v1176 = vunpack.c.l.bf16 %v1160
        %v1177 = vunpack.c.l.bf16 %v1161
        %v1178 = vunpack.c.l.bf16 %v1162
        %v1179 = vunpack.c.l.bf16 %v1163
        %v1180 = vunpack.c.l.bf16 %v1164
        %v1181 = vunpack.c.l.bf16 %v1165
        %v1182 = vunpack.c.l.bf16 %v1166
        %v1183 = vunpack.c.l.bf16 %v1167
        %v1184 = vunpack.c.l.bf16 %v1168
        %v1185 = vunpack.c.l.bf16 %v1169
        %v1186 = vunpack.c.l.bf16 %v1170
        %v1187 = vunpack.c.l.bf16 %v1171
        %v1188 = vmul.f32 %v1140, %v1172
        %v1189 = vmul.f32 %v1141, %v1173
        %v1190 = vmul.f32 %v1142, %v1174
        %v1191 = vmul.f32 %v1143, %v1175
        %v1192 = vmul.f32 %v1144, %v1176
        %v1193 = vmul.f32 %v1145, %v1177
        %v1194 = vmul.f32 %v1146, %v1178
        %v1195 = vmul.f32 %v1147, %v1179
        %v1196 = vmul.f32 %v1148, %v1180
        %v1197 = vmul.f32 %v1149, %v1181
        %v1198 = vmul.f32 %v1150, %v1182
        %v1199 = vmul.f32 %v1151, %v1183
        %v1200 = vmul.f32 %v1152, %v1184
        %v1201 = vmul.f32 %v1153, %v1185
        %v1202 = vmul.f32 %v1154, %v1186
        %v1203 = vmul.f32 %v1155, %v1187
        %v1204 = vlaneseq
        %v1205 = vand.u32 %v1204, 127
        %vm1206 = vcmp.eq.s32.totalorder %v1205, 32
        %v1207 = vsel %vm1206, 1.0, %v1188
        %v1208 = vsel %vm1206, 1.0, %v1189
        %v1209 = vsel %vm1206, 1.0, %v1190
        %v1210 = vsel %vm1206, 1.0, %v1191
        %v1211 = vsel %vm1206, 1.0, %v1192
        %v1212 = vsel %vm1206, 1.0, %v1193
        %v1213 = vsel %vm1206, 1.0, %v1194
        %v1214 = vsel %vm1206, 1.0, %v1195
        %v1215 = vsel %vm1206, 1.0, %v1196
        %v1216 = vsel %vm1206, 1.0, %v1197
        %v1217 = vsel %vm1206, 1.0, %v1198
        %v1218 = vsel %vm1206, 1.0, %v1199
        %v1219 = vsel %vm1206, 1.0, %v1200
        %v1220 = vsel %vm1206, 1.0, %v1201
        %v1221 = vsel %vm1206, 1.0, %v1202
        %v1222 = vsel %vm1206, 1.0, %v1203
        %s1223 = scalar_lea.vmem [#allocation2], %s460
        %1224 = vst [vmem:[%s1223] sm:$0xff] %v1207
        %1225 = vst [vmem:[%s1223 + $0x8] sm:$0xff] %v1208
        %1226 = vst [vmem:[%s1223 + $0x10] sm:$0xff] %v1209
        %1227 = vst [vmem:[%s1223 + $0x18] sm:$0xff] %v1210
        %1228 = vst [vmem:[%s1223 + $0x20] sm:$0xff] %v1211
        %1229 = vst [vmem:[%s1223 + $0x28] sm:$0xff] %v1212
        %1230 = vst [vmem:[%s1223 + $0x30] sm:$0xff] %v1213
        %1231 = vst [vmem:[%s1223 + $0x38] sm:$0xff] %v1214
        %1232 = vst [vmem:[%s1223 + $0x40] sm:$0xff] %v1215
        %1233 = vst [vmem:[%s1223 + $0x48] sm:$0xff] %v1216
        %1234 = vst [vmem:[%s1223 + $0x50] sm:$0xff] %v1217
        %1235 = vst [vmem:[%s1223 + $0x58] sm:$0xff] %v1218
        %1236 = vst [vmem:[%s1223 + $0x60] sm:$0xff] %v1219
        %1237 = vst [vmem:[%s1223 + $0x68] sm:$0xff] %v1220
        %1238 = vst [vmem:[%s1223 + $0x70] sm:$0xff] %v1221
        %1239 = vst [vmem:[%s1223 + $0x78] sm:$0xff] %v1222
      $region64: #{forward.1} parent=59 // pred_fallthru
        _
      %p1240 = scmp.eq.s32.totalorder %s25, 1
      // Predicated region
      $region65: #{forward.1} parent=59 // pred_check
        %p1241 = pneg %p1240
      $region66: #{forward.1} parent=59 // pred_check_branch
        %1243 = sbr.rel (%p1241) target = $region68
      $region67: #{forward.1} parent=59 // pred_region
        %v1244 = vld [vmem:[%s438] sm:$0xf]
        %v1245 = vld [vmem:[%s438 + $0x4] sm:$0xf]
        %v1246 = vld [vmem:[%s438 + $0x8] sm:$0xf]
        %v1247 = vld [vmem:[%s438 + $0xc] sm:$0xf]
        %v1248 = vld [vmem:[%s438 + $0x10] sm:$0xf]
        %v1249 = vld [vmem:[%s438 + $0x14] sm:$0xf]
        %v1250 = vld [vmem:[%s438 + $0x18] sm:$0xf]
        %v1251 = vld [vmem:[%s438 + $0x1c] sm:$0xf]
        %v1252 = vld [vmem:[%s438 + $0x20] sm:$0xf]
        %v1253 = vld [vmem:[%s438 + $0x24] sm:$0xf]
        %v1254 = vld [vmem:[%s438 + $0x28] sm:$0xf]
        %v1255 = vld [vmem:[%s438 + $0x2c] sm:$0xf]
        %v1256 = vld [vmem:[%s438 + $0x30] sm:$0xf]
        %v1257 = vld [vmem:[%s438 + $0x34] sm:$0xf]
        %v1258 = vld [vmem:[%s438 + $0x38] sm:$0xf]
        %v1259 = vld [vmem:[%s438 + $0x3c] sm:$0xf]
        %v1260 = vld [vmem:[#allocation2] sm:$0xff]
        %v1261 = vld [vmem:[#allocation2 + $0x8] sm:$0xff]
        %v1262 = vld [vmem:[#allocation2 + $0x10] sm:$0xff]
        %v1263 = vld [vmem:[#allocation2 + $0x18] sm:$0xff]
        %v1264 = vld [vmem:[#allocation2 + $0x20] sm:$0xff]
        %v1265 = vld [vmem:[#allocation2 + $0x28] sm:$0xff]
        %v1266 = vld [vmem:[#allocation2 + $0x30] sm:$0xff]
        %v1267 = vld [vmem:[#allocation2 + $0x38] sm:$0xff]
        %v1268 = vld [vmem:[#allocation2 + $0x40] sm:$0xff]
        %v1269 = vld [vmem:[#allocation2 + $0x48] sm:$0xff]
        %v1270 = vld [vmem:[#allocation2 + $0x50] sm:$0xff]
        %v1271 = vld [vmem:[#allocation2 + $0x58] sm:$0xff]
        %v1272 = vld [vmem:[#allocation2 + $0x60] sm:$0xff]
        %v1273 = vld [vmem:[#allocation2 + $0x68] sm:$0xff]
        %v1274 = vld [vmem:[#allocation2 + $0x70] sm:$0xff]
        %v1275 = vld [vmem:[#allocation2 + $0x78] sm:$0xff]
        %v1276 = vpack.c.bf16 %v1261, %v1260
        %v1277 = vpack.c.bf16 %v1263, %v1262
        %v1278 = vpack.c.bf16 %v1265, %v1264
        %v1279 = vpack.c.bf16 %v1267, %v1266
        %v1280 = vpack.c.bf16 %v1269, %v1268
        %v1281 = vpack.c.bf16 %v1271, %v1270
        %v1282 = vpack.c.bf16 %v1273, %v1272
        %v1283 = vpack.c.bf16 %v1275, %v1274
        %v1300 = vunpack.c.l.b16 %v1244
        %v1301 = vunpack.c.l.b16 %v1245
        %v1302 = vunpack.c.l.b16 %v1246
        %v1303 = vunpack.c.l.b16 %v1247
        %v1304 = vunpack.c.l.b16 %v1248
        %v1305 = vunpack.c.l.b16 %v1249
        %v1306 = vunpack.c.l.b16 %v1250
        %v1307 = vunpack.c.l.b16 %v1251
        %v1308 = vunpack.c.l.b16 %v1252
        %v1309 = vunpack.c.l.b16 %v1253
        %v1310 = vunpack.c.l.b16 %v1254
        %v1311 = vunpack.c.l.b16 %v1255
        %v1312 = vunpack.c.l.b16 %v1256
        %v1313 = vunpack.c.l.b16 %v1257
        %v1314 = vunpack.c.l.b16 %v1258
        %v1315 = vunpack.c.l.b16 %v1259
        %v1316 = vpack.c.b16 %v1301, %v1300
        %v1317 = vpack.c.b16 %v1303, %v1302
        %v1318 = vpack.c.b16 %v1305, %v1304
        %v1319 = vpack.c.b16 %v1307, %v1306
        %v1320 = vpack.c.b16 %v1309, %v1308
        %v1321 = vpack.c.b16 %v1311, %v1310
        %v1322 = vpack.c.b16 %v1313, %v1312
        %v1323 = vpack.c.b16 %v1315, %v1314
        %1332 = vmatprep.subr.bf16.mxu0 0
        %1333 = vmatpush1.bf16.msra.mxu0 %v1283
        %1334 = vmatprep.subr.bf16.mxu0 0
        %1335 = vmatpush1.bf16.msra.mxu0 %v1282
        %1336 = vmatprep.subr.bf16.mxu0 0
        %1337 = vmatpush1.bf16.msra.mxu0 %v1281
        %1338 = vmatprep.subr.bf16.mxu0 0
        %1339 = vmatpush1.bf16.msra.mxu0 %v1280
        %1340 = vmatprep.subr.bf16.mxu0 0
        %1341 = vmatpush1.bf16.msra.mxu0 %v1279
        %1342 = vmatprep.subr.bf16.mxu0 0
        %1343 = vmatpush1.bf16.msra.mxu0 %v1278
        %1344 = vmatprep.subr.bf16.mxu0 0
        %1345 = vmatpush1.bf16.msra.mxu0 %v1277
        %1346 = vmatprep.subr.bf16.mxu0 0
        %1347 = vmatpush1.bf16.msra.mxu0 %v1276
        %1348 = vmatprep.subr.bf16.mxu0 0
        %1349 = vmatpush2.bf16.msra.mxu0 0
        %1350 = vmatprep.subr.bf16.mxu0 0
        %1351 = vmatpush2.bf16.msra.mxu0 0
        %1352 = vmatprep.subr.bf16.mxu0 0
        %1353 = vmatpush2.bf16.msra.mxu0 0
        %1354 = vmatprep.subr.bf16.mxu0 0
        %1355 = vmatpush2.bf16.msra.mxu0 0
        %1356 = vmatprep.subr.bf16.mxu0 0
        %1357 = vmatpush2.bf16.msra.mxu0 0
        %1358 = vmatprep.subr.bf16.mxu0 0
        %1359 = vmatpush2.bf16.msra.mxu0 0
        %1360 = vmatprep.subr.bf16.mxu0 0
        %1361 = vmatpush2.bf16.msra.mxu0 0
        %1362 = vmatprep.subr.bf16.mxu0 0
        %1363 = vmatpush2.bf16.msra.mxu0 0
        %1364 = vmatprep.mubr.bf16.mxu0 0
        %1365 = vmatmul.mubr.bf16.gmra.mxu0 %v1316
        %v1366 = vpop.f32.mrf.mxu0
        %v1367 = vadd.f32 0.0, %v1366
        %v1368 = vpop.f32.mrf.mxu0
        %v1369 = vpop.f32.mrf.mxu0
        %v1370 = vadd.f32 0.0, %v1369
        %v1371 = vpop.f32.mrf.mxu0
        %1372 = vmatprep.mubr.bf16.mxu0 0
        %1373 = vmatmul.mubr.bf16.gmra.mxu0 %v1317
        %v1374 = vpop.f32.mrf.mxu0
        %v1375 = vadd.f32 0.0, %v1374
        %v1376 = vpop.f32.mrf.mxu0
        %v1377 = vpop.f32.mrf.mxu0
        %v1378 = vadd.f32 0.0, %v1377
        %v1379 = vpop.f32.mrf.mxu0
        %1380 = vmatprep.mubr.bf16.mxu0 0
        %1381 = vmatmul.mubr.bf16.gmra.mxu0 %v1318
        %v1382 = vpop.f32.mrf.mxu0
        %v1383 = vadd.f32 0.0, %v1382
        %v1384 = vpop.f32.mrf.mxu0
        %v1385 = vpop.f32.mrf.mxu0
        %v1386 = vadd.f32 0.0, %v1385
        %v1387 = vpop.f32.mrf.mxu0
        %1388 = vmatprep.mubr.bf16.mxu0 0
        %1389 = vmatmul.mubr.bf16.gmra.mxu0 %v1319
        %v1390 = vpop.f32.mrf.mxu0
        %v1391 = vadd.f32 0.0, %v1390
        %v1392 = vpop.f32.mrf.mxu0
        %v1393 = vpop.f32.mrf.mxu0
        %v1394 = vadd.f32 0.0, %v1393
        %v1395 = vpop.f32.mrf.mxu0
        %1396 = vmatprep.mubr.bf16.mxu0 0
        %1397 = vmatmul.mubr.bf16.gmra.mxu0 %v1320
        %v1398 = vpop.f32.mrf.mxu0
        %v1399 = vadd.f32 0.0, %v1398
        %v1400 = vpop.f32.mrf.mxu0
        %v1401 = vpop.f32.mrf.mxu0
        %v1402 = vadd.f32 0.0, %v1401
        %v1403 = vpop.f32.mrf.mxu0
        %1404 = vmatprep.mubr.bf16.mxu0 0
        %1405 = vmatmul.mubr.bf16.gmra.mxu0 %v1321
        %v1406 = vpop.f32.mrf.mxu0
        %v1407 = vadd.f32 0.0, %v1406
        %v1408 = vpop.f32.mrf.mxu0
        %v1409 = vpop.f32.mrf.mxu0
        %v1410 = vadd.f32 0.0, %v1409
        %v1411 = vpop.f32.mrf.mxu0
        %1412 = vmatprep.mubr.bf16.mxu0 0
        %1413 = vmatmul.mubr.bf16.gmra.mxu0 %v1322
        %v1414 = vpop.f32.mrf.mxu0
        %v1415 = vadd.f32 0.0, %v1414
        %v1416 = vpop.f32.mrf.mxu0
        %v1417 = vpop.f32.mrf.mxu0
        %v1418 = vadd.f32 0.0, %v1417
        %v1419 = vpop.f32.mrf.mxu0
        %1420 = vmatprep.mubr.bf16.mxu0 0
        %1421 = vmatmul.mubr.bf16.gmra.mxu0 %v1323
        %v1422 = vpop.f32.mrf.mxu0
        %v1423 = vadd.f32 0.0, %v1422
        %v1424 = vpop.f32.mrf.mxu0
        %v1425 = vpop.f32.mrf.mxu0
        %v1426 = vadd.f32 0.0, %v1425
        %v1427 = vpop.f32.mrf.mxu0
        %1428 = vdwg.mxu0
        %v1429 = vmax.f32 %v1367, 1.0
        %v1430 = vmax.f32 %v1370, 1.0
        %v1431 = vmax.f32 %v1375, 1.0
        %v1432 = vmax.f32 %v1378, 1.0
        %v1433 = vmax.f32 %v1383, 1.0
        %v1434 = vmax.f32 %v1386, 1.0
        %v1435 = vmax.f32 %v1391, 1.0
        %v1436 = vmax.f32 %v1394, 1.0
        %v1437 = vmax.f32 %v1399, 1.0
        %v1438 = vmax.f32 %v1402, 1.0
        %v1439 = vmax.f32 %v1407, 1.0
        %v1440 = vmax.f32 %v1410, 1.0
        %v1441 = vmax.f32 %v1415, 1.0
        %v1442 = vmax.f32 %v1418, 1.0
        %v1443 = vmax.f32 %v1423, 1.0
        %v1444 = vmax.f32 %v1426, 1.0
        %v1445 = vrcp.pop %v1429
        %v1446 = vrcp.pop %v1430
        %v1447 = vrcp.pop %v1431
        %v1448 = vrcp.pop %v1432
        %v1449 = vrcp.pop %v1433
        %v1450 = vrcp.pop %v1434
        %v1451 = vrcp.pop %v1435
        %v1452 = vrcp.pop %v1436
        %v1453 = vrcp.pop %v1437
        %v1454 = vrcp.pop %v1438
        %v1455 = vrcp.pop %v1439
        %v1456 = vrcp.pop %v1440
        %v1457 = vrcp.pop %v1441
        %v1458 = vrcp.pop %v1442
        %v1459 = vrcp.pop %v1443
        %v1460 = vrcp.pop %v1444
        %1462 = vset.pattern.permute.xlu0 32
        %1463 = vperm.xlu0 %1462, %v1445
        %v1464 = vpop.permute.xlu0 %1463
        %1467 = vset.pattern.permute.xlu0 32
        %1468 = vperm.xlu0 %1467, %v1446
        %v1469 = vpop.permute.xlu0 %1468
        %1472 = vset.pattern.permute.xlu0 32
        %1473 = vperm.xlu0 %1472, %v1447
        %v1474 = vpop.permute.xlu0 %1473
        %1477 = vset.pattern.permute.xlu0 32
        %1478 = vperm.xlu0 %1477, %v1448
        %v1479 = vpop.permute.xlu0 %1478
        %1482 = vset.pattern.permute.xlu0 32
        %1483 = vperm.xlu0 %1482, %v1449
        %v1484 = vpop.permute.xlu0 %1483
        %1487 = vset.pattern.permute.xlu0 32
        %1488 = vperm.xlu0 %1487, %v1450
        %v1489 = vpop.permute.xlu0 %1488
        %1492 = vset.pattern.permute.xlu0 32
        %1493 = vperm.xlu0 %1492, %v1451
        %v1494 = vpop.permute.xlu0 %1493
        %1497 = vset.pattern.permute.xlu0 32
        %1498 = vperm.xlu0 %1497, %v1452
        %v1499 = vpop.permute.xlu0 %1498
        %1502 = vset.pattern.permute.xlu0 32
        %1503 = vperm.xlu0 %1502, %v1453
        %v1504 = vpop.permute.xlu0 %1503
        %1507 = vset.pattern.permute.xlu0 32
        %1508 = vperm.xlu0 %1507, %v1454
        %v1509 = vpop.permute.xlu0 %1508
        %1512 = vset.pattern.permute.xlu0 32
        %1513 = vperm.xlu0 %1512, %v1455
        %v1514 = vpop.permute.xlu0 %1513
        %1517 = vset.pattern.permute.xlu0 32
        %1518 = vperm.xlu0 %1517, %v1456
        %v1519 = vpop.permute.xlu0 %1518
        %1522 = vset.pattern.permute.xlu0 32
        %1523 = vperm.xlu0 %1522, %v1457
        %v1524 = vpop.permute.xlu0 %1523
        %1527 = vset.pattern.permute.xlu0 32
        %1528 = vperm.xlu0 %1527, %v1458
        %v1529 = vpop.permute.xlu0 %1528
        %1532 = vset.pattern.permute.xlu0 32
        %1533 = vperm.xlu0 %1532, %v1459
        %v1534 = vpop.permute.xlu0 %1533
        %1537 = vset.pattern.permute.xlu0 32
        %1538 = vperm.xlu0 %1537, %v1460
        %v1539 = vpop.permute.xlu0 %1538
        %v1541 = vmul.f32 %v1367, %v1464
        %v1542 = vmul.f32 %v1370, %v1469
        %v1543 = vmul.f32 %v1375, %v1474
        %v1544 = vmul.f32 %v1378, %v1479
        %v1545 = vmul.f32 %v1383, %v1484
        %v1546 = vmul.f32 %v1386, %v1489
        %v1547 = vmul.f32 %v1391, %v1494
        %v1548 = vmul.f32 %v1394, %v1499
        %v1549 = vmul.f32 %v1399, %v1504
        %v1550 = vmul.f32 %v1402, %v1509
        %v1551 = vmul.f32 %v1407, %v1514
        %v1552 = vmul.f32 %v1410, %v1519
        %v1553 = vmul.f32 %v1415, %v1524
        %v1554 = vmul.f32 %v1418, %v1529
        %v1555 = vmul.f32 %v1423, %v1534
        %v1556 = vmul.f32 %v1426, %v1539
        %s1557 = scalar_lea.vmem [#allocation2], %s460
        %v1558 = vld [vmem:[%s1557] sm:$0xff]
        %v1559 = vld [vmem:[%s1557 + $0x8] sm:$0xff]
        %v1560 = vld [vmem:[%s1557 + $0x10] sm:$0xff]
        %v1561 = vld [vmem:[%s1557 + $0x18] sm:$0xff]
        %v1562 = vld [vmem:[%s1557 + $0x20] sm:$0xff]
        %v1563 = vld [vmem:[%s1557 + $0x28] sm:$0xff]
        %v1564 = vld [vmem:[%s1557 + $0x30] sm:$0xff]
        %v1565 = vld [vmem:[%s1557 + $0x38] sm:$0xff]
        %v1566 = vld [vmem:[%s1557 + $0x40] sm:$0xff]
        %v1567 = vld [vmem:[%s1557 + $0x48] sm:$0xff]
        %v1568 = vld [vmem:[%s1557 + $0x50] sm:$0xff]
        %v1569 = vld [vmem:[%s1557 + $0x58] sm:$0xff]
        %v1570 = vld [vmem:[%s1557 + $0x60] sm:$0xff]
        %v1571 = vld [vmem:[%s1557 + $0x68] sm:$0xff]
        %v1572 = vld [vmem:[%s1557 + $0x70] sm:$0xff]
        %v1573 = vld [vmem:[%s1557 + $0x78] sm:$0xff]
        %v1574 = vld [vmem:[%s7] sm:$0xff]
        %v1575 = vld [vmem:[%s7 + $0x8] sm:$0xff]
        %v1576 = vld [vmem:[%s7 + $0x10] sm:$0xff]
        %v1577 = vld [vmem:[%s7 + $0x18] sm:$0xff]
        %v1578 = vld [vmem:[%s7 + $0x20] sm:$0xff]
        %v1579 = vld [vmem:[%s7 + $0x28] sm:$0xff]
        %v1580 = vld [vmem:[%s7 + $0x30] sm:$0xff]
        %v1581 = vld [vmem:[%s7 + $0x38] sm:$0xff]
        %v1582 = vld [vmem:[%s7 + $0x40] sm:$0xff]
        %v1583 = vld [vmem:[%s7 + $0x48] sm:$0xff]
        %v1584 = vld [vmem:[%s7 + $0x50] sm:$0xff]
        %v1585 = vld [vmem:[%s7 + $0x58] sm:$0xff]
        %v1586 = vld [vmem:[%s7 + $0x60] sm:$0xff]
        %v1587 = vld [vmem:[%s7 + $0x68] sm:$0xff]
        %v1588 = vld [vmem:[%s7 + $0x70] sm:$0xff]
        %v1589 = vld [vmem:[%s7 + $0x78] sm:$0xff]
        %v1590 = vld [vmem:[%s8] sm:$0xff]
        %v1591 = vld [vmem:[%s8 + $0x8] sm:$0xff]
        %v1592 = vld [vmem:[%s8 + $0x10] sm:$0xff]
        %v1593 = vld [vmem:[%s8 + $0x18] sm:$0xff]
        %v1594 = vld [vmem:[%s8 + $0x20] sm:$0xff]
        %v1595 = vld [vmem:[%s8 + $0x28] sm:$0xff]
        %v1596 = vld [vmem:[%s8 + $0x30] sm:$0xff]
        %v1597 = vld [vmem:[%s8 + $0x38] sm:$0xff]
        %v1598 = vld [vmem:[%s8 + $0x40] sm:$0xff]
        %v1599 = vld [vmem:[%s8 + $0x48] sm:$0xff]
        %v1600 = vld [vmem:[%s8 + $0x50] sm:$0xff]
        %v1601 = vld [vmem:[%s8 + $0x58] sm:$0xff]
        %v1602 = vld [vmem:[%s8 + $0x60] sm:$0xff]
        %v1603 = vld [vmem:[%s8 + $0x68] sm:$0xff]
        %v1604 = vld [vmem:[%s8 + $0x70] sm:$0xff]
        %v1605 = vld [vmem:[%s8 + $0x78] sm:$0xff]
        %1606 = vmatprep.subr.mxu0 0.0
        %1607 = vmatpush1.msra.mxu0 %v1605
        %1608 = vmatprep.subr.mxu0 0.0
        %1609 = vmatpush1.msra.mxu0 %v1604
        %1610 = vmatprep.subr.mxu0 0.0
        %1611 = vmatpush1.msra.mxu0 %v1603
        %1612 = vmatprep.subr.mxu0 0.0
        %1613 = vmatpush1.msra.mxu0 %v1602
        %1614 = vmatprep.subr.mxu0 0.0
        %1615 = vmatpush1.msra.mxu0 %v1601
        %1616 = vmatprep.subr.mxu0 0.0
        %1617 = vmatpush1.msra.mxu0 %v1600
        %1618 = vmatprep.subr.mxu0 0.0
        %1619 = vmatpush1.msra.mxu0 %v1599
        %1620 = vmatprep.subr.mxu0 0.0
        %1621 = vmatpush1.msra.mxu0 %v1598
        %1622 = vmatprep.subr.mxu0 0.0
        %1623 = vmatpush1.msra.mxu0 %v1597
        %1624 = vmatprep.subr.mxu0 0.0
        %1625 = vmatpush1.msra.mxu0 %v1596
        %1626 = vmatprep.subr.mxu0 0.0
        %1627 = vmatpush1.msra.mxu0 %v1595
        %1628 = vmatprep.subr.mxu0 0.0
        %1629 = vmatpush1.msra.mxu0 %v1594
        %1630 = vmatprep.subr.mxu0 0.0
        %1631 = vmatpush1.msra.mxu0 %v1593
        %1632 = vmatprep.subr.mxu0 0.0
        %1633 = vmatpush1.msra.mxu0 %v1592
        %1634 = vmatprep.subr.mxu0 0.0
        %1635 = vmatpush1.msra.mxu0 %v1591
        %1636 = vmatprep.subr.mxu0 0.0
        %1637 = vmatpush1.msra.mxu0 %v1590
        %1638 = vmatprep.subr.mxu0 0.0
        %1639 = vmatpush2.msra.mxu0 0.0
        %1640 = vmatprep.subr.mxu0 0.0
        %1641 = vmatpush2.msra.mxu0 0.0
        %1642 = vmatprep.subr.mxu0 0.0
        %1643 = vmatpush2.msra.mxu0 0.0
        %1644 = vmatprep.subr.mxu0 0.0
        %1645 = vmatpush2.msra.mxu0 0.0
        %1646 = vmatprep.subr.mxu0 0.0
        %1647 = vmatpush2.msra.mxu0 0.0
        %1648 = vmatprep.subr.mxu0 0.0
        %1649 = vmatpush2.msra.mxu0 0.0
        %1650 = vmatprep.subr.mxu0 0.0
        %1651 = vmatpush2.msra.mxu0 0.0
        %1652 = vmatprep.subr.mxu0 0.0
        %1653 = vmatpush2.msra.mxu0 0.0
        %1654 = vmatprep.subr.mxu0 0.0
        %1655 = vmatpush2.msra.mxu0 0.0
        %1656 = vmatprep.subr.mxu0 0.0
        %1657 = vmatpush2.msra.mxu0 0.0
        %1658 = vmatprep.subr.mxu0 0.0
        %1659 = vmatpush2.msra.mxu0 0.0
        %1660 = vmatprep.subr.mxu0 0.0
        %1661 = vmatpush2.msra.mxu0 0.0
        %1662 = vmatprep.subr.mxu0 0.0
        %1663 = vmatpush2.msra.mxu0 0.0
        %1664 = vmatprep.subr.mxu0 0.0
        %1665 = vmatpush2.msra.mxu0 0.0
        %1666 = vmatprep.subr.mxu0 0.0
        %1667 = vmatpush2.msra.mxu0 0.0
        %1668 = vmatprep.subr.mxu0 0.0
        %1669 = vmatpush2.msra.mxu0 0.0
        %1670 = vmatprep.mubr.f32.mxu0 0.0
        %1671 = vmatmul.mubr.f32.gmra.mxu0 %v1558
        %v1672 = vpop.f32.mrf.mxu0
        %v1673 = vadd.f32 0.0, %v1672
        %v1674 = vpop.f32.mrf.mxu0
        %1675 = vmatprep.mubr.f32.mxu0 0.0
        %1676 = vmatmul.mubr.f32.gmra.mxu0 %v1559
        %v1677 = vpop.f32.mrf.mxu0
        %v1678 = vadd.f32 0.0, %v1677
        %v1679 = vpop.f32.mrf.mxu0
        %1680 = vmatprep.mubr.f32.mxu0 0.0
        %1681 = vmatmul.mubr.f32.gmra.mxu0 %v1560
        %v1682 = vpop.f32.mrf.mxu0
        %v1683 = vadd.f32 0.0, %v1682
        %v1684 = vpop.f32.mrf.mxu0
        %1685 = vmatprep.mubr.f32.mxu0 0.0
        %1686 = vmatmul.mubr.f32.gmra.mxu0 %v1561
        %v1687 = vpop.f32.mrf.mxu0
        %v1688 = vadd.f32 0.0, %v1687
        %v1689 = vpop.f32.mrf.mxu0
        %1690 = vmatprep.mubr.f32.mxu0 0.0
        %1691 = vmatmul.mubr.f32.gmra.mxu0 %v1562
        %v1692 = vpop.f32.mrf.mxu0
        %v1693 = vadd.f32 0.0, %v1692
        %v1694 = vpop.f32.mrf.mxu0
        %1695 = vmatprep.mubr.f32.mxu0 0.0
        %1696 = vmatmul.mubr.f32.gmra.mxu0 %v1563
        %v1697 = vpop.f32.mrf.mxu0
        %v1698 = vadd.f32 0.0, %v1697
        %v1699 = vpop.f32.mrf.mxu0
        %1700 = vmatprep.mubr.f32.mxu0 0.0
        %1701 = vmatmul.mubr.f32.gmra.mxu0 %v1564
        %v1702 = vpop.f32.mrf.mxu0
        %v1703 = vadd.f32 0.0, %v1702
        %v1704 = vpop.f32.mrf.mxu0
        %1705 = vmatprep.mubr.f32.mxu0 0.0
        %1706 = vmatmul.mubr.f32.gmra.mxu0 %v1565
        %v1707 = vpop.f32.mrf.mxu0
        %v1708 = vadd.f32 0.0, %v1707
        %v1709 = vpop.f32.mrf.mxu0
        %1710 = vmatprep.mubr.f32.mxu0 0.0
        %1711 = vmatmul.mubr.f32.gmra.mxu0 %v1566
        %v1712 = vpop.f32.mrf.mxu0
        %v1713 = vadd.f32 0.0, %v1712
        %v1714 = vpop.f32.mrf.mxu0
        %1715 = vmatprep.mubr.f32.mxu0 0.0
        %1716 = vmatmul.mubr.f32.gmra.mxu0 %v1567
        %v1717 = vpop.f32.mrf.mxu0
        %v1718 = vadd.f32 0.0, %v1717
        %v1719 = vpop.f32.mrf.mxu0
        %1720 = vmatprep.mubr.f32.mxu0 0.0
        %1721 = vmatmul.mubr.f32.gmra.mxu0 %v1568
        %v1722 = vpop.f32.mrf.mxu0
        %v1723 = vadd.f32 0.0, %v1722
        %v1724 = vpop.f32.mrf.mxu0
        %1725 = vmatprep.mubr.f32.mxu0 0.0
        %1726 = vmatmul.mubr.f32.gmra.mxu0 %v1569
        %v1727 = vpop.f32.mrf.mxu0
        %v1728 = vadd.f32 0.0, %v1727
        %v1729 = vpop.f32.mrf.mxu0
        %1730 = vmatprep.mubr.f32.mxu0 0.0
        %1731 = vmatmul.mubr.f32.gmra.mxu0 %v1570
        %v1732 = vpop.f32.mrf.mxu0
        %v1733 = vadd.f32 0.0, %v1732
        %v1734 = vpop.f32.mrf.mxu0
        %1735 = vmatprep.mubr.f32.mxu0 0.0
        %1736 = vmatmul.mubr.f32.gmra.mxu0 %v1571
        %v1737 = vpop.f32.mrf.mxu0
        %v1738 = vadd.f32 0.0, %v1737
        %v1739 = vpop.f32.mrf.mxu0
        %1740 = vmatprep.mubr.f32.mxu0 0.0
        %1741 = vmatmul.mubr.f32.gmra.mxu0 %v1572
        %v1742 = vpop.f32.mrf.mxu0
        %v1743 = vadd.f32 0.0, %v1742
        %v1744 = vpop.f32.mrf.mxu0
        %1745 = vmatprep.mubr.f32.mxu0 0.0
        %1746 = vmatmul.mubr.f32.gmra.mxu0 %v1573
        %v1747 = vpop.f32.mrf.mxu0
        %v1748 = vadd.f32 0.0, %v1747
        %v1749 = vpop.f32.mrf.mxu0
        %1750 = vdwg.mxu0
        %1751 = vmatprep.subr.mxu0 0.0
        %1752 = vmatpush1.msra.mxu0 %v1589
        %1753 = vmatprep.subr.mxu0 0.0
        %1754 = vmatpush1.msra.mxu0 %v1588
        %1755 = vmatprep.subr.mxu0 0.0
        %1756 = vmatpush1.msra.mxu0 %v1587
        %1757 = vmatprep.subr.mxu0 0.0
        %1758 = vmatpush1.msra.mxu0 %v1586
        %1759 = vmatprep.subr.mxu0 0.0
        %1760 = vmatpush1.msra.mxu0 %v1585
        %1761 = vmatprep.subr.mxu0 0.0
        %1762 = vmatpush1.msra.mxu0 %v1584
        %1763 = vmatprep.subr.mxu0 0.0
        %1764 = vmatpush1.msra.mxu0 %v1583
        %1765 = vmatprep.subr.mxu0 0.0
        %1766 = vmatpush1.msra.mxu0 %v1582
        %1767 = vmatprep.subr.mxu0 0.0
        %1768 = vmatpush1.msra.mxu0 %v1581
        %1769 = vmatprep.subr.mxu0 0.0
        %1770 = vmatpush1.msra.mxu0 %v1580
        %1771 = vmatprep.subr.mxu0 0.0
        %1772 = vmatpush1.msra.mxu0 %v1579
        %1773 = vmatprep.subr.mxu0 0.0
        %1774 = vmatpush1.msra.mxu0 %v1578
        %1775 = vmatprep.subr.mxu0 0.0
        %1776 = vmatpush1.msra.mxu0 %v1577
        %1777 = vmatprep.subr.mxu0 0.0
        %1778 = vmatpush1.msra.mxu0 %v1576
        %1779 = vmatprep.subr.mxu0 0.0
        %1780 = vmatpush1.msra.mxu0 %v1575
        %1781 = vmatprep.subr.mxu0 0.0
        %1782 = vmatpush1.msra.mxu0 %v1574
        %1783 = vmatprep.subr.mxu0 0.0
        %1784 = vmatpush2.msra.mxu0 0.0
        %1785 = vmatprep.subr.mxu0 0.0
        %1786 = vmatpush2.msra.mxu0 0.0
        %1787 = vmatprep.subr.mxu0 0.0
        %1788 = vmatpush2.msra.mxu0 0.0
        %1789 = vmatprep.subr.mxu0 0.0
        %1790 = vmatpush2.msra.mxu0 0.0
        %1791 = vmatprep.subr.mxu0 0.0
        %1792 = vmatpush2.msra.mxu0 0.0
        %1793 = vmatprep.subr.mxu0 0.0
        %1794 = vmatpush2.msra.mxu0 0.0
        %1795 = vmatprep.subr.mxu0 0.0
        %1796 = vmatpush2.msra.mxu0 0.0
        %1797 = vmatprep.subr.mxu0 0.0
        %1798 = vmatpush2.msra.mxu0 0.0
        %1799 = vmatprep.subr.mxu0 0.0
        %1800 = vmatpush2.msra.mxu0 0.0
        %1801 = vmatprep.subr.mxu0 0.0
        %1802 = vmatpush2.msra.mxu0 0.0
        %1803 = vmatprep.subr.mxu0 0.0
        %1804 = vmatpush2.msra.mxu0 0.0
        %1805 = vmatprep.subr.mxu0 0.0
        %1806 = vmatpush2.msra.mxu0 0.0
        %1807 = vmatprep.subr.mxu0 0.0
        %1808 = vmatpush2.msra.mxu0 0.0
        %1809 = vmatprep.subr.mxu0 0.0
        %1810 = vmatpush2.msra.mxu0 0.0
        %1811 = vmatprep.subr.mxu0 0.0
        %1812 = vmatpush2.msra.mxu0 0.0
        %1813 = vmatprep.subr.mxu0 0.0
        %1814 = vmatpush2.msra.mxu0 0.0
        %1815 = vmatprep.mubr.f32.mxu0 0.0
        %1816 = vmatmul.mubr.f32.gmra.mxu0 %v1541
        %v1817 = vpop.f32.mrf.mxu0
        %v1818 = vadd.f32 %v1673, %v1817
        %v1819 = vpop.f32.mrf.mxu0
        %1820 = vmatprep.mubr.f32.mxu0 0.0
        %1821 = vmatmul.mubr.f32.gmra.mxu0 %v1542
        %v1822 = vpop.f32.mrf.mxu0
        %v1823 = vadd.f32 %v1678, %v1822
        %v1824 = vpop.f32.mrf.mxu0
        %1825 = vmatprep.mubr.f32.mxu0 0.0
        %1826 = vmatmul.mubr.f32.gmra.mxu0 %v1543
        %v1827 = vpop.f32.mrf.mxu0
        %v1828 = vadd.f32 %v1683, %v1827
        %v1829 = vpop.f32.mrf.mxu0
        %1830 = vmatprep.mubr.f32.mxu0 0.0
        %1831 = vmatmul.mubr.f32.gmra.mxu0 %v1544
        %v1832 = vpop.f32.mrf.mxu0
        %v1833 = vadd.f32 %v1688, %v1832
        %v1834 = vpop.f32.mrf.mxu0
        %1835 = vmatprep.mubr.f32.mxu0 0.0
        %1836 = vmatmul.mubr.f32.gmra.mxu0 %v1545
        %v1837 = vpop.f32.mrf.mxu0
        %v1838 = vadd.f32 %v1693, %v1837
        %v1839 = vpop.f32.mrf.mxu0
        %1840 = vmatprep.mubr.f32.mxu0 0.0
        %1841 = vmatmul.mubr.f32.gmra.mxu0 %v1546
        %v1842 = vpop.f32.mrf.mxu0
        %v1843 = vadd.f32 %v1698, %v1842
        %v1844 = vpop.f32.mrf.mxu0
        %1845 = vmatprep.mubr.f32.mxu0 0.0
        %1846 = vmatmul.mubr.f32.gmra.mxu0 %v1547
        %v1847 = vpop.f32.mrf.mxu0
        %v1848 = vadd.f32 %v1703, %v1847
        %v1849 = vpop.f32.mrf.mxu0
        %1850 = vmatprep.mubr.f32.mxu0 0.0
        %1851 = vmatmul.mubr.f32.gmra.mxu0 %v1548
        %v1852 = vpop.f32.mrf.mxu0
        %v1853 = vadd.f32 %v1708, %v1852
        %v1854 = vpop.f32.mrf.mxu0
        %1855 = vmatprep.mubr.f32.mxu0 0.0
        %1856 = vmatmul.mubr.f32.gmra.mxu0 %v1549
        %v1857 = vpop.f32.mrf.mxu0
        %v1858 = vadd.f32 %v1713, %v1857
        %v1859 = vpop.f32.mrf.mxu0
        %1860 = vmatprep.mubr.f32.mxu0 0.0
        %1861 = vmatmul.mubr.f32.gmra.mxu0 %v1550
        %v1862 = vpop.f32.mrf.mxu0
        %v1863 = vadd.f32 %v1718, %v1862
        %v1864 = vpop.f32.mrf.mxu0
        %1865 = vmatprep.mubr.f32.mxu0 0.0
        %1866 = vmatmul.mubr.f32.gmra.mxu0 %v1551
        %v1867 = vpop.f32.mrf.mxu0
        %v1868 = vadd.f32 %v1723, %v1867
        %v1869 = vpop.f32.mrf.mxu0
        %1870 = vmatprep.mubr.f32.mxu0 0.0
        %1871 = vmatmul.mubr.f32.gmra.mxu0 %v1552
        %v1872 = vpop.f32.mrf.mxu0
        %v1873 = vadd.f32 %v1728, %v1872
        %v1874 = vpop.f32.mrf.mxu0
        %1875 = vmatprep.mubr.f32.mxu0 0.0
        %1876 = vmatmul.mubr.f32.gmra.mxu0 %v1553
        %v1877 = vpop.f32.mrf.mxu0
        %v1878 = vadd.f32 %v1733, %v1877
        %v1879 = vpop.f32.mrf.mxu0
        %1880 = vmatprep.mubr.f32.mxu0 0.0
        %1881 = vmatmul.mubr.f32.gmra.mxu0 %v1554
        %v1882 = vpop.f32.mrf.mxu0
        %v1883 = vadd.f32 %v1738, %v1882
        %v1884 = vpop.f32.mrf.mxu0
        %1885 = vmatprep.mubr.f32.mxu0 0.0
        %1886 = vmatmul.mubr.f32.gmra.mxu0 %v1555
        %v1887 = vpop.f32.mrf.mxu0
        %v1888 = vadd.f32 %v1743, %v1887
        %v1889 = vpop.f32.mrf.mxu0
        %1890 = vmatprep.mubr.f32.mxu0 0.0
        %1891 = vmatmul.mubr.f32.gmra.mxu0 %v1556
        %v1892 = vpop.f32.mrf.mxu0
        %v1893 = vadd.f32 %v1748, %v1892
        %v1894 = vpop.f32.mrf.mxu0
        %1895 = vdwg.mxu0
        %v1896 = vld [vmem:[%s9] sm:$0x1]
        %v1898 = vlaneseq
        %v1899 = vshrl.u32 %v1898, 7
        %v1900 = vsub.s32 0, %v1899
        %v1901 = vrot.slane %v1896, %v1900
        %v1903 = vadd.f32 %v1818, %v1901
        %v1904 = vadd.f32 %v1823, %v1901
        %v1905 = vadd.f32 %v1828, %v1901
        %v1906 = vadd.f32 %v1833, %v1901
        %v1907 = vadd.f32 %v1838, %v1901
        %v1908 = vadd.f32 %v1843, %v1901
        %v1909 = vadd.f32 %v1848, %v1901
        %v1910 = vadd.f32 %v1853, %v1901
        %v1911 = vadd.f32 %v1858, %v1901
        %v1912 = vadd.f32 %v1863, %v1901
        %v1913 = vadd.f32 %v1868, %v1901
        %v1914 = vadd.f32 %v1873, %v1901
        %v1915 = vadd.f32 %v1878, %v1901
        %v1916 = vadd.f32 %v1883, %v1901
        %v1917 = vadd.f32 %v1888, %v1901
        %v1918 = vadd.f32 %v1893, %v1901
        %1919 = vst [vmem:[%s456] sm:$0xff] %v1903
        %1920 = vst [vmem:[%s456 + $0x8] sm:$0xff] %v1904
        %1921 = vst [vmem:[%s456 + $0x10] sm:$0xff] %v1905
        %1922 = vst [vmem:[%s456 + $0x18] sm:$0xff] %v1906
        %1923 = vst [vmem:[%s456 + $0x20] sm:$0xff] %v1907
        %1924 = vst [vmem:[%s456 + $0x28] sm:$0xff] %v1908
        %1925 = vst [vmem:[%s456 + $0x30] sm:$0xff] %v1909
        %1926 = vst [vmem:[%s456 + $0x38] sm:$0xff] %v1910
        %1927 = vst [vmem:[%s456 + $0x40] sm:$0xff] %v1911
        %1928 = vst [vmem:[%s456 + $0x48] sm:$0xff] %v1912
        %1929 = vst [vmem:[%s456 + $0x50] sm:$0xff] %v1913
        %1930 = vst [vmem:[%s456 + $0x58] sm:$0xff] %v1914
        %1931 = vst [vmem:[%s456 + $0x60] sm:$0xff] %v1915
        %1932 = vst [vmem:[%s456 + $0x68] sm:$0xff] %v1916
        %1933 = vst [vmem:[%s456 + $0x70] sm:$0xff] %v1917
        %1934 = vst [vmem:[%s456 + $0x78] sm:$0xff] %v1918
      $region68: #{forward.1} parent=59 // pred_fallthru
        _
      %s1935 = smul.u32 %s26, %s25
      %s1936 = smul.u32 16, %s1935
      %p1937 = scmp.lt.s32.totalorder %s1936, 15
      %s1938 = scalar_select %p1937, %s1936, 15
      %s1939 = smul.addr %s1938, 8
      %s1940 = scalar_lea.vmem %s10, %s1939
      // Predicated region
      $region69: #{forward.1} parent=59 // pred_check
        %p1941 = pneg %p288
      $region70: #{forward.1} parent=59 // pred_check_branch
        %1943 = sbr.rel (%p1941) target = $region72
      $region71: #{forward.1} parent=59 // pred_region
        %s1944 = smul.u32 %s26, %s25
        %s1945 = smul.u32 16, %s1944
      $region72: #{forward.1} parent=59 // pred_fallthru
        _
    $region60: #{forward.1} parent=5 // pred_fallthru
      _
    %p1946 = scmp.le.s32.totalorder 2, %s16
    // Predicated region
    $region73: #{forward.1} parent=5 // pred_check
      %p1947 = pneg %p1946
    $region74: #{forward.1} parent=5 // pred_check_branch
      %1949 = sbr.rel (%p1947) target = $region76
    $region75: #{forward.1} parent=5 // pred_region
      %s1950 = ssub.s32 %s16, 2
      // Predicated region
      $region77: #{forward.1} parent=75 // pred_check
        %p1951 = pneg %p294
      $region78: #{forward.1} parent=75 // pred_check_branch
        %1953 = sbr.rel (%p1951) target = $region80
      $region79: #{forward.1} parent=75 // pred_region
        %s1954 = smul.u32 %s28, %s27
        %s1955 = smul.u32 16, %s1954
        %p1956 = scmp.lt.s32.totalorder %s1955, 15
        %s1957 = scalar_select %p1956, %s1955, 15
        %s1958 = smul.addr %s1957, 8
        %s1959 = scalar_lea.vmem %s10, %s1958
      $region80: #{forward.1} parent=75 // pred_fallthru
        _
    $region76: #{forward.1} parent=5 // pred_fallthru
      _
  $region6: #{forward.1} parent=0 // loop_footer
    %s20 = sadd.s32 1, %s16
  $region7: #{forward.1} parent=0 // loop_footer_branch
    %15 = sbr.rel target = $region3
  $region8: #{forward.1} parent=0 // loop_exit
    _

</llo_original>
